<compile_context>
chip_gen: v7x
topology: tpu7x:2x2x1
jax: 0.10.0
libtpu: 0.0.40
codegen_flags: <defaults>
</compile_context>

<pallas_src>
import functools

import jax
import jax.numpy as jnp
from jax.experimental import pallas as pl
from jax.experimental.pallas import tpu as pltpu


def _round_up(x, m):
    return (x + m - 1) // m * m


def _conv_stats_kernel(x_ref, w_ref, g_ref, b_ref, stats_ref,
                       sum_ref, ssq_ref, shift_ref, *, ohw, m_actual, eps, ch):
    """Pass 1: per-channel batch statistics of y = W @ X, accumulated across the grid.

    x_ref:  (1, k_p, tp)  im2col patches, one image / one pixel tile (pixels on lanes)
    w_ref:  (c_p, k_p)    reshaped conv weights (resident across the grid)
    g_ref/b_ref: (c_p, 1) gamma / beta columns
    stats_ref: (c_p, 2)   output: col 0 = scale = gamma*rsqrt(var+eps), col 1 = offset
    sum_ref/ssq_ref: (c_p, 128) lane-partial accumulators; shift_ref: (c_p, 1)
    """
    ni, pi = pl.program_id(0), pl.program_id(1)
    n_img, n_pt = pl.num_programs(0), pl.num_programs(1)
    first = jnp.logical_and(ni == 0, pi == 0)
    last = jnp.logical_and(ni == n_img - 1, pi == n_pt - 1)
    ragged = pi == n_pt - 1          # padded pixel columns can only live in the last tile

    tp = x_ref.shape[2]
    n_chunks = tp // ch
    n_sub = ch // 128

    w = w_ref[...]

    @pl.when(first)
    def _init():
        sum_ref[...] = jnp.zeros_like(sum_ref)
        ssq_ref[...] = jnp.zeros_like(ssq_ref)
        stats_ref[...] = jnp.zeros_like(stats_ref)
        # Shift = channel values of the first output pixel; stabilizes the single-pass
        # variance  E[(y-s)^2] - (E[y]-s)^2  against catastrophic cancellation.
        y0 = jnp.dot(w, x_ref[0, :, 0:128], preferred_element_type=jnp.float32)
        shift_ref[...] = y0[:, 0:1]

    shift = shift_ref[...]           # (c_p, 1)

    def accumulate(masked):
        # Static chunk loop over the pixel tile: bounds vreg live ranges, static lane
        # offsets only, one scratch read-modify-write per chunk.
        for c in range(n_chunks):
            s = c * ch
            xc = x_ref[0, :, s:s + ch]                                   # (k_p, ch)
            yc = jnp.dot(w, xc, preferred_element_type=jnp.float32)      # (c_p, ch)
            if masked:
                pix = jax.lax.broadcasted_iota(jnp.int32, (1, ch), 1) + pi * tp + s
                valid = pix < ohw
                yv = jnp.where(valid, yc, 0.0)
                dc = jnp.where(valid, yc - shift, 0.0)
            else:
                yv = yc
                dc = yc - shift
            d2 = dc * dc
            # Lane-group partial sums (pure VPU adds); the cross-lane reduction is
            # deferred to the single finalize step.
            part_s = yv[:, 0:128]
            part_q = d2[:, 0:128]
            for g in range(1, n_sub):
                sl = slice(g * 128, (g + 1) * 128)
                part_s = part_s + yv[:, sl]
                part_q = part_q + d2[:, sl]
            sum_ref[...] += part_s
            ssq_ref[...] += part_q

    @pl.when(jnp.logical_not(ragged))
    def _full_tile():
        accumulate(False)

    @pl.when(ragged)
    def _ragged_tile():
        accumulate(True)

    @pl.when(last)
    def _finalize():
        inv_m = 1.0 / m_actual
        mean = jnp.sum(sum_ref[...], axis=1, keepdims=True) * inv_m      # (c_p, 1)
        ssq = jnp.sum(ssq_ref[...], axis=1, keepdims=True)
        dm = mean - shift_ref[...]
        var = jnp.maximum(ssq * inv_m - dm * dm, 0.0)    # biased var, clamped >= 0
        scale = g_ref[...] * jax.lax.rsqrt(var + eps)    # gamma / sqrt(var + eps)
        offset = b_ref[...] - mean * scale               # beta - mean * scale
        stats_ref[:, 0:1] = scale
        stats_ref[:, 1:2] = offset


def _conv_bn_apply_kernel(x_ref, w_ref, stats_ref, o_ref, *, ch):
    """Pass 2: recompute y = W @ X per tile, apply the fused BN FMA, store NCHW-major."""
    w = w_ref[...]
    scale = stats_ref[:, 0:1]        # (c_p, 1)
    offset = stats_ref[:, 1:2]
    cout = o_ref.shape[1]
    tp = x_ref.shape[2]
    for c in range(tp // ch):
        s = c * ch
        xc = x_ref[0, :, s:s + ch]                                       # (k_p, ch)
        yc = jnp.dot(w, xc, preferred_element_type=jnp.float32)          # (c_p, ch)
        yc = yc * scale + offset
        o_ref[0, :, s:s + ch] = yc[:cout, :]


def conv_block_forward(x, weight, bias, gamma, beta, *, stride, padding,
                       eps=1e-5, block_pix=1024, compute_dtype=jnp.float32):
    """x: (N, Cin, H, W) NCHW; weight: (Cout, Cin, KH, KW); bias/gamma/beta: (Cout,).

    compute_dtype=jnp.bfloat16 feeds the MXU in bf16 (f32 accumulation) for v6e/v7x
    throughput (loosen validation tolerance accordingly); stats/normalization stay f32.
    """
    n, cin, h, w_in = x.shape
    cout, _, kh, kw = weight.shape
    oh = (h + 2 * padding - kh) // stride + 1
    ow = (w_in + 2 * padding - kw) // stride + 1
    ohw = oh * ow

    # Conv bias followed by training-mode BatchNorm is an exact no-op (removed by the
    # mean subtraction, variance unchanged) -> drop it from the fused kernel.
    del bias

    # --- glue: im2col in channel-major order (N, Cin*KH*KW, OH*OW); K ordered (ci, i, j)
    # to match weight.reshape(Cout, Cin*KH*KW).  Output pixels land on lanes in-kernel.
    xp = jnp.pad(x, ((0, 0), (0, 0), (padding, padding), (padding, padding)))
    pats = [xp[:, :, i:i + stride * oh:stride, j:j + stride * ow:stride]
            for i in range(kh) for j in range(kw)]
    x_col = jnp.stack(pats, axis=2).reshape(n, cin * kh * kw, ohw)
    # TODO(synk): fuse this shifted-window gather into the kernel grid to avoid the
    # KH*KW-x patch-matrix HBM blow-up.

    k_dim = cin * kh * kw
    k_p = _round_up(k_dim, 128)      # lane-dense contraction dim (ResUNet34 K already big)
    c_p = _round_up(cout, 128)       # sublane-dense channel dim inside the kernel

    # Pixel tile: as large as keeps a double-buffered x block around ~8 MiB of VMEM.
    itemsize = jnp.dtype(compute_dtype).itemsize
    tp_cap = max(128, (8 * 1024 * 1024 // (2 * itemsize * k_p)) // 128 * 128)
    tp = min(block_pix, tp_cap, _round_up(ohw, 128))
    ohw_p = _round_up(ohw, tp)
    n_pt = ohw_p // tp
    ch = next(c for c in (512, 256, 128) if tp % c == 0)

    x_mat = jnp.pad(x_col, ((0, 0), (0, k_p - k_dim),
                            (0, ohw_p - ohw))).astype(compute_dtype)
    w_mat = jnp.pad(weight.reshape(cout, k_dim),
                    ((0, c_p - cout), (0, k_p - k_dim))).astype(compute_dtype)
    g_col = jnp.pad(gamma.astype(jnp.float32).reshape(cout, 1), ((0, c_p - cout), (0, 0)))
    b_col = jnp.pad(beta.astype(jnp.float32).reshape(cout, 1), ((0, c_p - cout), (0, 0)))

    m_actual = n * ohw
    vmem_limit = 32 * 1024 * 1024            # explicit, fits all generations incl. v7x

    x_spec = pl.BlockSpec((1, k_p, tp), lambda ni, pi: (ni, 0, pi))
    w_spec = pl.BlockSpec((c_p, k_p), lambda ni, pi: (0, 0))
    col_spec = pl.BlockSpec((c_p, 1), lambda ni, pi: (0, 0))
    stats_spec = pl.BlockSpec((c_p, 2), lambda ni, pi: (0, 0))

    stats = pl.pallas_call(
        functools.partial(_conv_stats_kernel, ohw=ohw, m_actual=m_actual, eps=eps, ch=ch),
        grid=(n, n_pt),
        in_specs=[x_spec, w_spec, col_spec, col_spec],
        out_specs=stats_spec,
        out_shape=jax.ShapeDtypeStruct((c_p, 2), jnp.float32),
        scratch_shapes=[
            pltpu.VMEM((c_p, 128), jnp.float32),   # per-channel lane-partial sum
            pltpu.VMEM((c_p, 128), jnp.float32),   # per-channel lane-partial shifted ssq
            pltpu.VMEM((c_p, 1), jnp.float32),     # per-channel shift (variance stabilizer)
        ],
        compiler_params=pltpu.CompilerParams(
            dimension_semantics=("arbitrary", "arbitrary"),   # stats carried across grid
            vmem_limit_bytes=vmem_limit),
    )(x_mat, w_mat, g_col, b_col)

    out = pl.pallas_call(
        functools.partial(_conv_bn_apply_kernel, ch=ch),
        grid=(n, n_pt),
        in_specs=[x_spec, w_spec, stats_spec],
        out_specs=pl.BlockSpec((1, cout, tp), lambda ni, pi: (ni, 0, pi)),
        out_shape=jax.ShapeDtypeStruct((n, cout, ohw_p), jnp.float32),
        compiler_params=pltpu.CompilerParams(
            dimension_semantics=("parallel", "parallel"),     # tiles fully independent
            vmem_limit_bytes=vmem_limit),
    )(x_mat, w_mat, stats)

    if ohw_p != ohw:
        out = out[:, :, :ohw]
    # Output is already channel-major: just an un-flatten of the pixel axis (no transpose).
    return out.reshape(n, cout, oh, ow)


def _reference(x, weight, bias, gamma, beta, *, stride, padding, eps=1e-5):
    y = jax.lax.conv_general_dilated(
        x, weight,
        window_strides=(stride, stride),
        padding=[(padding, padding), (padding, padding)],
        dimension_numbers=("NCHW", "OIHW", "NCHW"),
    ) + bias.reshape(1, -1, 1, 1)
    mean = jnp.mean(y, axis=(0, 2, 3), keepdims=True)
    var = jnp.var(y, axis=(0, 2, 3), keepdims=True)
    return (y - mean) * jax.lax.rsqrt(var + eps) * gamma.reshape(1, -1, 1, 1) \
        + beta.reshape(1, -1, 1, 1)


if __name__ == "__main__":
    # ConvBlock(in_channels=4, out_channels=8, kernel_size=3, stride=1, padding=1)
    in_channels, out_channels, kernel_size, stride, padding = 4, 8, 3, 1, 1

    key = jax.random.PRNGKey(0)
    k_x, k_w, k_b, k_g, k_bt = jax.random.split(key, 5)

    x = jax.random.normal(k_x, (2, in_channels, 16, 16), dtype=jnp.float32)

    weight = 0.1 * jax.random.normal(
        k_w, (out_channels, in_channels, kernel_size, kernel_size), dtype=jnp.float32)
    bias = 0.1 * jax.random.normal(k_b, (out_channels,), dtype=jnp.float32)
    gamma = 1.0 + 0.1 * jax.random.normal(k_g, (out_channels,), dtype=jnp.float32)
    beta = 0.1 * jax.random.normal(k_bt, (out_channels,), dtype=jnp.float32)

    out = conv_block_forward(x, weight, bias, gamma, beta,
                             stride=stride, padding=padding)
    out = jax.block_until_ready(out)

    ref = _reference(x, weight, bias, gamma, beta, stride=stride, padding=padding)
    assert out.shape == (2, out_channels, 16, 16), out.shape
    assert jnp.allclose(out, ref, atol=1e-4, rtol=1e-4), \
        float(jnp.max(jnp.abs(out - ref)))

    print("KERNEL_OK")
</pallas_src>

<mosaic_0001>
module attributes {stable_mosaic.version = 11 : i64} {
  func.func @_conv_stats_kernel(%arg0: i32, %arg1: i32, %arg2: memref<1x128x256xf32, #tpu.memory_space<vmem>>, %arg3: memref<128x128xf32, #tpu.memory_space<vmem>>, %arg4: memref<128x1xf32, #tpu.memory_space<vmem>>, %arg5: memref<128x1xf32, #tpu.memory_space<vmem>>, %arg6: memref<128x2xf32, #tpu.memory_space<vmem>>, %arg7: memref<128x128xf32, #tpu.memory_space<vmem>>, %arg8: memref<128x128xf32, #tpu.memory_space<vmem>>, %arg9: memref<128x1xf32, #tpu.memory_space<vmem>>) attributes {dimension_semantics = [#tpu.dimension_semantics<arbitrary>, #tpu.dimension_semantics<arbitrary>], iteration_bounds = array<i64: 2, 1>, scalar_prefetch = 0 : i64, scratch_operands = 3 : i64, tpu.core_type = #tpu.core_type<tc>, window_params = [{transform_indices = @transform_0, window_bounds = array<i64: 1, 128, 256>}, {pipeline_mode = #tpu.pipeline_mode<synchronous>, transform_indices = @transform_1, window_bounds = array<i64: 128, 128>}, {pipeline_mode = #tpu.pipeline_mode<synchronous>, transform_indices = @transform_2, window_bounds = array<i64: 128, 1>}, {pipeline_mode = #tpu.pipeline_mode<synchronous>, transform_indices = @transform_3, window_bounds = array<i64: 128, 1>}, {pipeline_mode = #tpu.pipeline_mode<synchronous>, transform_indices = @transform_4, window_bounds = array<i64: 128, 2>}]} {
    %c0_i32 = arith.constant 0 : i32
    %0 = arith.cmpi eq, %arg0, %c0_i32 : i32
    %c0_i32_0 = arith.constant 0 : i32
    %1 = arith.cmpi eq, %arg1, %c0_i32_0 : i32
    %2 = arith.andi %0, %1 : i1
    %c1_i32 = arith.constant 1 : i32
    %3 = arith.cmpi eq, %arg0, %c1_i32 : i32
    %c0_i32_1 = arith.constant 0 : i32
    %4 = arith.cmpi eq, %arg1, %c0_i32_1 : i32
    %5 = arith.andi %3, %4 : i1
    %c0_i32_2 = arith.constant 0 : i32
    %6 = arith.cmpi eq, %arg1, %c0_i32_2 : i32
    %c0 = arith.constant 0 : index
    %c0_3 = arith.constant 0 : index
    %7 = vector.load %arg3[%c0, %c0_3] : memref<128x128xf32, #tpu.memory_space<vmem>>, vector<128x128xf32>
    %8 = arith.extui %2 : i1 to i32
    %c0_i32_4 = arith.constant 0 : i32
    %9 = arith.cmpi ne, %8, %c0_i32_4 : i32
    scf.if %9 {
      %cst = arith.constant 0.000000e+00 : f32
      %18 = vector.broadcast %cst : f32 to vector<128x128xf32>
      %c0_10 = arith.constant 0 : index
      %c0_11 = arith.constant 0 : index
      %19 = vector.load %arg7[%c0_10, %c0_11] : memref<128x128xf32, #tpu.memory_space<vmem>>, vector<128x128xf32>
      tpu.vector_store %arg7[%c0_10, %c0_11], %18 {strides = array<i32>} : memref<128x128xf32, #tpu.memory_space<vmem>>, vector<128x128xf32>,
      %cst_12 = arith.constant 0.000000e+00 : f32
      %20 = vector.broadcast %cst_12 : f32 to vector<128x128xf32>
      %c0_13 = arith.constant 0 : index
      %c0_14 = arith.constant 0 : index
      %21 = vector.load %arg8[%c0_13, %c0_14] : memref<128x128xf32, #tpu.memory_space<vmem>>, vector<128x128xf32>
      tpu.vector_store %arg8[%c0_13, %c0_14], %20 {strides = array<i32>} : memref<128x128xf32, #tpu.memory_space<vmem>>, vector<128x128xf32>,
      %cst_15 = arith.constant 0.000000e+00 : f32
      %22 = vector.broadcast %cst_15 : f32 to vector<128x2xf32>
      %c0_16 = arith.constant 0 : index
      %c0_17 = arith.constant 0 : index
      %23 = vector.load %arg6[%c0_16, %c0_17] : memref<128x2xf32, #tpu.memory_space<vmem>>, vector<128x2xf32>
      tpu.vector_store %arg6[%c0_16, %c0_17], %22 {strides = array<i32>} : memref<128x2xf32, #tpu.memory_space<vmem>>, vector<128x2xf32>,
      %c0_18 = arith.constant 0 : index
      %c0_19 = arith.constant 0 : index
      %c0_20 = arith.constant 0 : index
      %24 = vector.load %arg2[%c0_18, %c0_19, %c0_20] : memref<1x128x256xf32, #tpu.memory_space<vmem>>, vector<1x128x128xf32>
      %25 = vector.shape_cast %24 : vector<1x128x128xf32> to vector<128x128xf32>
      %cst_21 = arith.constant dense<0.000000e+00> : vector<128x128xf32>
      %26 = tpu.matmul %7, %25, %cst_21 {dimension_numbers = #tpu.dot_dimension_numbers<[1], [0], [0], [1], [0, 0, 1, 1], [], []>} : vector<128x128xf32>, vector<128x128xf32>, vector<128x128xf32> -> vector<128x128xf32>
      %27 = vector.extract_strided_slice %26 {offsets = [0, 0], sizes = [128, 1], strides = [1, 1]} : vector<128x128xf32> to vector<128x1xf32>
      %c0_22 = arith.constant 0 : index
      %c0_23 = arith.constant 0 : index
      %28 = vector.load %arg9[%c0_22, %c0_23] : memref<128x1xf32, #tpu.memory_space<vmem>>, vector<128x1xf32>
      tpu.vector_store %arg9[%c0_22, %c0_23], %27 {strides = array<i32>} : memref<128x1xf32, #tpu.memory_space<vmem>>, vector<128x1xf32>,
    } else {
    }
    %c0_5 = arith.constant 0 : index
    %c0_6 = arith.constant 0 : index
    %10 = vector.load %arg9[%c0_5, %c0_6] : memref<128x1xf32, #tpu.memory_space<vmem>>, vector<128x1xf32>
    %true = arith.constant true
    %11 = arith.xori %6, %true : i1
    %12 = arith.extui %11 : i1 to i32
    %c0_i32_7 = arith.constant 0 : i32
    %13 = arith.cmpi ne, %12, %c0_i32_7 : i32
    scf.if %13 {
      %c0_10 = arith.constant 0 : index
      %c0_11 = arith.constant 0 : index
      %c0_12 = arith.constant 0 : index
      %18 = vector.load %arg2[%c0_10, %c0_11, %c0_12] : memref<1x128x256xf32, #tpu.memory_space<vmem>>, vector<1x128x256xf32>
      %19 = vector.shape_cast %18 : vector<1x128x256xf32> to vector<128x256xf32>
      %cst = arith.constant dense<0.000000e+00> : vector<128x256xf32>
      %20 = tpu.matmul %7, %19, %cst {dimension_numbers = #tpu.dot_dimension_numbers<[1], [0], [0], [1], [0, 0, 1, 1], [], []>} : vector<128x128xf32>, vector<128x256xf32>, vector<128x256xf32> -> vector<128x256xf32>
      %21 = vector.broadcast %10 : vector<128x1xf32> to vector<128x256xf32>
      %22 = arith.subf %20, %21 : vector<128x256xf32>
      %23 = arith.mulf %22, %22 : vector<128x256xf32>
      %24 = vector.extract_strided_slice %20 {offsets = [0, 0], sizes = [128, 128], strides = [1, 1]} : vector<128x256xf32> to vector<128x128xf32>
      %25 = vector.extract_strided_slice %23 {offsets = [0, 0], sizes = [128, 128], strides = [1, 1]} : vector<128x256xf32> to vector<128x128xf32>
      %26 = vector.extract_strided_slice %20 {offsets = [0, 128], sizes = [128, 128], strides = [1, 1]} : vector<128x256xf32> to vector<128x128xf32>
      %27 = arith.addf %24, %26 : vector<128x128xf32>
      %28 = vector.extract_strided_slice %23 {offsets = [0, 128], sizes = [128, 128], strides = [1, 1]} : vector<128x256xf32> to vector<128x128xf32>
      %29 = arith.addf %25, %28 : vector<128x128xf32>
      %c0_13 = arith.constant 0 : index
      %c0_14 = arith.constant 0 : index
      %30 = vector.load %arg7[%c0_13, %c0_14] : memref<128x128xf32, #tpu.memory_space<vmem>>, vector<128x128xf32>
      %31 = arith.addf %30, %27 : vector<128x128xf32>
      %c0_15 = arith.constant 0 : index
      %c0_16 = arith.constant 0 : index
      %32 = vector.load %arg7[%c0_15, %c0_16] : memref<128x128xf32, #tpu.memory_space<vmem>>, vector<128x128xf32>
      tpu.vector_store %arg7[%c0_15, %c0_16], %31 {strides = array<i32>} : memref<128x128xf32, #tpu.memory_space<vmem>>, vector<128x128xf32>,
      %c0_17 = arith.constant 0 : index
      %c0_18 = arith.constant 0 : index
      %33 = vector.load %arg8[%c0_17, %c0_18] : memref<128x128xf32, #tpu.memory_space<vmem>>, vector<128x128xf32>
      %34 = arith.addf %33, %29 : vector<128x128xf32>
      %c0_19 = arith.constant 0 : index
      %c0_20 = arith.constant 0 : index
      %35 = vector.load %arg8[%c0_19, %c0_20] : memref<128x128xf32, #tpu.memory_space<vmem>>, vector<128x128xf32>
      tpu.vector_store %arg8[%c0_19, %c0_20], %34 {strides = array<i32>} : memref<128x128xf32, #tpu.memory_space<vmem>>, vector<128x128xf32>,
    } else {
    }
    %14 = arith.extui %6 : i1 to i32
    %c0_i32_8 = arith.constant 0 : i32
    %15 = arith.cmpi ne, %14, %c0_i32_8 : i32
    scf.if %15 {
      %c0_10 = arith.constant 0 : index
      %c0_11 = arith.constant 0 : index
      %c0_12 = arith.constant 0 : index
      %18 = vector.load %arg2[%c0_10, %c0_11, %c0_12] : memref<1x128x256xf32, #tpu.memory_space<vmem>>, vector<1x128x256xf32>
      %19 = vector.shape_cast %18 : vector<1x128x256xf32> to vector<128x256xf32>
      %cst = arith.constant dense<0.000000e+00> : vector<128x256xf32>
      %20 = tpu.matmul %7, %19, %cst {dimension_numbers = #tpu.dot_dimension_numbers<[1], [0], [0], [1], [0, 0, 1, 1], [], []>} : vector<128x128xf32>, vector<128x256xf32>, vector<128x256xf32> -> vector<128x256xf32>
      %21 = tpu.iota {dimensions = array<i32: 1>} : vector<1x256xi32>
      %c256_i32 = arith.constant 256 : i32
      %22 = arith.muli %arg1, %c256_i32 : i32
      %23 = vector.broadcast %22 : i32 to vector<1x256xi32>
      %24 = arith.addi %21, %23 : vector<1x256xi32>
      %c0_i32_13 = arith.constant 0 : i32
      %25 = vector.broadcast %c0_i32_13 : i32 to vector<1x256xi32>
      %26 = arith.addi %24, %25 : vector<1x256xi32>
      %c256_i32_14 = arith.constant 256 : i32
      %27 = vector.broadcast %c256_i32_14 : i32 to vector<1x256xi32>
      %28 = arith.cmpi slt, %26, %27 : vector<1x256xi32>
      %cst_15 = arith.constant 0.000000e+00 : f32
      %29 = vector.shape_cast %28 : vector<1x256xi1> to vector<1x256xi1>
      %30 = vector.broadcast %29 : vector<1x256xi1> to vector<128x256xi1>
      %31 = vector.broadcast %cst_15 : f32 to vector<128x256xf32>
      %32 = arith.select %30, %20, %31 : vector<128x256xi1>, vector<128x256xf32>
      %33 = vector.broadcast %10 : vector<128x1xf32> to vector<128x256xf32>
      %34 = arith.subf %20, %33 : vector<128x256xf32>
      %cst_16 = arith.constant 0.000000e+00 : f32
      %35 = vector.shape_cast %28 : vector<1x256xi1> to vector<1x256xi1>
      %36 = vector.broadcast %35 : vector<1x256xi1> to vector<128x256xi1>
      %37 = vector.broadcast %cst_16 : f32 to vector<128x256xf32>
      %38 = arith.select %36, %34, %37 : vector<128x256xi1>, vector<128x256xf32>
      %39 = arith.mulf %38, %38 : vector<128x256xf32>
      %40 = vector.extract_strided_slice %32 {offsets = [0, 0], sizes = [128, 128], strides = [1, 1]} : vector<128x256xf32> to vector<128x128xf32>
      %41 = vector.extract_strided_slice %39 {offsets = [0, 0], sizes = [128, 128], strides = [1, 1]} : vector<128x256xf32> to vector<128x128xf32>
      %42 = vector.extract_strided_slice %32 {offsets = [0, 128], sizes = [128, 128], strides = [1, 1]} : vector<128x256xf32> to vector<128x128xf32>
      %43 = arith.addf %40, %42 : vector<128x128xf32>
      %44 = vector.extract_strided_slice %39 {offsets = [0, 128], sizes = [128, 128], strides = [1, 1]} : vector<128x256xf32> to vector<128x128xf32>
      %45 = arith.addf %41, %44 : vector<128x128xf32>
      %c0_17 = arith.constant 0 : index
      %c0_18 = arith.constant 0 : index
      %46 = vector.load %arg7[%c0_17, %c0_18] : memref<128x128xf32, #tpu.memory_space<vmem>>, vector<128x128xf32>
      %47 = arith.addf %46, %43 : vector<128x128xf32>
      %c0_19 = arith.constant 0 : index
      %c0_20 = arith.constant 0 : index
      %48 = vector.load %arg7[%c0_19, %c0_20] : memref<128x128xf32, #tpu.memory_space<vmem>>, vector<128x128xf32>
      tpu.vector_store %arg7[%c0_19, %c0_20], %47 {strides = array<i32>} : memref<128x128xf32, #tpu.memory_space<vmem>>, vector<128x128xf32>,
      %c0_21 = arith.constant 0 : index
      %c0_22 = arith.constant 0 : index
      %49 = vector.load %arg8[%c0_21, %c0_22] : memref<128x128xf32, #tpu.memory_space<vmem>>, vector<128x128xf32>
      %50 = arith.addf %49, %45 : vector<128x128xf32>
      %c0_23 = arith.constant 0 : index
      %c0_24 = arith.constant 0 : index
      %51 = vector.load %arg8[%c0_23, %c0_24] : memref<128x128xf32, #tpu.memory_space<vmem>>, vector<128x128xf32>
      tpu.vector_store %arg8[%c0_23, %c0_24], %50 {strides = array<i32>} : memref<128x128xf32, #tpu.memory_space<vmem>>, vector<128x128xf32>,
    } else {
    }
    %16 = arith.extui %5 : i1 to i32
    %c0_i32_9 = arith.constant 0 : i32
    %17 = arith.cmpi ne, %16, %c0_i32_9 : i32
    scf.if %17 {
      %c0_10 = arith.constant 0 : index
      %c0_11 = arith.constant 0 : index
      %18 = vector.load %arg7[%c0_10, %c0_11] : memref<128x128xf32, #tpu.memory_space<vmem>>, vector<128x128xf32>
      %cst = arith.constant dense<0.000000e+00> : vector<128xf32>
      %19 = vector.multi_reduction <add>, %18, %cst [1] : vector<128x128xf32> to vector<128xf32>
      %20 = vector.shape_cast %19 : vector<128xf32> to vector<128x1xf32>
      %cst_12 = arith.constant 0.001953125 : f32
      %21 = vector.broadcast %cst_12 : f32 to vector<128x1xf32>
      %22 = arith.mulf %20, %21 : vector<128x1xf32>
      %c0_13 = arith.constant 0 : index
      %c0_14 = arith.constant 0 : index
      %23 = vector.load %arg8[%c0_13, %c0_14] : memref<128x128xf32, #tpu.memory_space<vmem>>, vector<128x128xf32>
      %cst_15 = arith.constant dense<0.000000e+00> : vector<128xf32>
      %24 = vector.multi_reduction <add>, %23, %cst_15 [1] : vector<128x128xf32> to vector<128xf32>
      %25 = vector.shape_cast %24 : vector<128xf32> to vector<128x1xf32>
      %c0_16 = arith.constant 0 : index
      %c0_17 = arith.constant 0 : index
      %26 = vector.load %arg9[%c0_16, %c0_17] : memref<128x1xf32, #tpu.memory_space<vmem>>, vector<128x1xf32>
      %27 = arith.subf %22, %26 : vector<128x1xf32>
      %cst_18 = arith.constant 0.001953125 : f32
      %28 = vector.broadcast %cst_18 : f32 to vector<128x1xf32>
      %29 = arith.mulf %25, %28 : vector<128x1xf32>
      %30 = arith.mulf %27, %27 : vector<128x1xf32>
      %31 = arith.subf %29, %30 : vector<128x1xf32>
      %cst_19 = arith.constant 0.000000e+00 : f32
      %32 = vector.broadcast %cst_19 : f32 to vector<128x1xf32>
      %33 = arith.maximumf %31, %32 : vector<128x1xf32>
      %c0_20 = arith.constant 0 : index
      %c0_21 = arith.constant 0 : index
      %34 = vector.load %arg4[%c0_20, %c0_21] : memref<128x1xf32, #tpu.memory_space<vmem>>, vector<128x1xf32>
      %cst_22 = arith.constant 9.99999974E-6 : f32
      %35 = vector.broadcast %cst_22 : f32 to vector<128x1xf32>
      %36 = arith.addf %33, %35 : vector<128x1xf32>
      %37 = math.rsqrt %36 : vector<128x1xf32>
      %38 = arith.mulf %34, %37 : vector<128x1xf32>
      %c0_23 = arith.constant 0 : index
      %c0_24 = arith.constant 0 : index
      %39 = vector.load %arg5[%c0_23, %c0_24] : memref<128x1xf32, #tpu.memory_space<vmem>>, vector<128x1xf32>
      %40 = arith.mulf %22, %38 : vector<128x1xf32>
      %41 = arith.subf %39, %40 : vector<128x1xf32>
      %c0_25 = arith.constant 0 : index
      %c0_26 = arith.constant 0 : index
      %42 = vector.load %arg6[%c0_25, %c0_26] : memref<128x2xf32, #tpu.memory_space<vmem>>, vector<128x1xf32>
      tpu.vector_store %arg6[%c0_25, %c0_26], %38 {strides = array<i32>} : memref<128x2xf32, #tpu.memory_space<vmem>>, vector<128x1xf32>,
      %c0_27 = arith.constant 0 : index
      %c1 = arith.constant 1 : index
      %43 = vector.load %arg6[%c0_27, %c1] : memref<128x2xf32, #tpu.memory_space<vmem>>, vector<128x1xf32>
      tpu.vector_store %arg6[%c0_27, %c1], %41 {strides = array<i32>} : memref<128x2xf32, #tpu.memory_space<vmem>>, vector<128x1xf32>,
    } else {
    }
    return
  }
  func.func @transform_0(%arg0: i32, %arg1: i32) -> (i32, i32, i32) {
    %c0_i32 = arith.constant 0 : i32
    %c0_i32_0 = arith.constant 0 : i32
    return %arg0, %c0_i32, %arg1 : i32, i32, i32
  }
  func.func @transform_1(%arg0: i32, %arg1: i32) -> (i32, i32) {
    %c0_i32 = arith.constant 0 : i32
    %c0_i32_0 = arith.constant 0 : i32
    %c0_i32_1 = arith.constant 0 : i32
    return %c0_i32, %c0_i32_0 : i32, i32
  }
  func.func @transform_2(%arg0: i32, %arg1: i32) -> (i32, i32) {
    %c0_i32 = arith.constant 0 : i32
    %c0_i32_0 = arith.constant 0 : i32
    %c0_i32_1 = arith.constant 0 : i32
    return %c0_i32, %c0_i32_0 : i32, i32
  }
  func.func @transform_3(%arg0: i32, %arg1: i32) -> (i32, i32) {
    %c0_i32 = arith.constant 0 : i32
    %c0_i32_0 = arith.constant 0 : i32
    %c0_i32_1 = arith.constant 0 : i32
    return %c0_i32, %c0_i32_0 : i32, i32
  }
  func.func @transform_4(%arg0: i32, %arg1: i32) -> (i32, i32) {
    %c0_i32 = arith.constant 0 : i32
    %c0_i32_0 = arith.constant 0 : i32
    %c0_i32_1 = arith.constant 0 : i32
    return %c0_i32, %c0_i32_0 : i32, i32
  }
}

</mosaic_0001>

<llo_original>
// kernel: tpu_custom_call.1
$region0: #{tpu_custom_call.1}
  #allocation0 [shape = 'u32[]', space=smem, size = 0x4, offset = 0x4, fixed_abs, tag = 'smem constant byte address 0x4 - core index']
  #allocation1 [shape = 'u32[144,128]{1,0:T(1,128)}', space=vmem, size = 0x12000, scoped, tag = 'internal scratch']
  #allocation2 [shape = 'f32[128,128]{1,0:T(8,128)}', space=vmem, size = 0x10000, scoped, tag = 'scratch operand']
  #allocation3 [shape = 'f32[128,128]{1,0:T(8,128)}', space=vmem, size = 0x10000, scoped, tag = 'scratch operand']
  #allocation4 [shape = 'f32[128,1]{1,0:T(8,128)}', space=vmem, size = 0x10000, scoped, tag = 'scratch operand']
  %s0 = inlined_call_operand.hbm [shape: f32[2,128,256], index: 0, kind: input, shape index: {}]
  %s1 = inlined_call_operand.vmem [shape: f32[128,128], index: 1, kind: input, shape index: {}]
  %s2 = inlined_call_operand.vmem [shape: f32[128,1], index: 2, kind: input, shape index: {}]
  %s3 = inlined_call_operand.vmem [shape: f32[128,1], index: 3, kind: input, shape index: {}]
  %s4 = inlined_call_operand.vmem [shape: f32[128,2], index: 4, kind: output, shape index: {}]
  %s5 = sld [smem:[#allocation0]]
  $region69: #{tpu_custom_call.1} parent=0
    _
  %s7 = ssub.s32 1, %s5
  %s8 = scalar_select 0, %s7, %s5
  $region1: #{tpu_custom_call.1} parent=0
    #allocation5 [shape = 'u8[262144]{0}', space=vmem, size = 0x40000, scoped, tag = 'input window, operand 0']
    #allocation6 [shape = 's32[2]{0}', space=sflag, size = 0x8, scoped, tag = 'scoped memory for tpu_custom_call.1']
    %9 = vsyncpa [#allocation6], 0
    %s10 = scalar_lea.sflag [#allocation6], 1
    %11 = vsyncpa %s10, 0
    loop: start=0, step=1, limit=4
    $region2: #{tpu_custom_call.1} parent=1 // loop_pre_header
      _
    $region3: #{tpu_custom_call.1} parent=1 // loop_header
      %s13 = sphi 0, %s17
      %p14 = scmp.ge.s32.totalorder %s13, 4
      %s20 = sphi 0, %s32
      %s21 = sphi 0, %s28
      %s22 = sphi 0, %s20
      %s23 = sphi 0, %s21
      %s24 = sphi 0, %s22
      %s25 = sphi 0, %s23
      %s37 = sphi 0, %s39
      %s40 = sphi 0, %s37
      %s41 = sphi 0, %s40
      %s57 = sphi 0, %s41
      %s61 = sphi 0, %s61
      %s63 = sphi 0, %s61
      %s64 = sphi 0, %s63
      %s78 = sphi 0, %s64
      %s82 = sphi 0, %s82
      %s84 = sphi 0, %s82
      %s85 = sphi 0, %s84
      %s99 = sphi 0, %s85
      %s103 = sphi 0, %s103
      %s105 = sphi 0, %s103
      %s106 = sphi 0, %s105
      %s120 = sphi 0, %s106
      %s124 = sphi 0, %s124
      %s126 = sphi 0, %s124
      %s127 = sphi 0, %s126
      %s141 = sphi 0, %s127
    $region4: #{tpu_custom_call.1} parent=1 // loop_header_branch
      %16 = sbr.rel (%p14) target = $region8
    $region5: #{tpu_custom_call.1} parent=1 // loop_body
      %s18 = ssub.s32 %s13, 1
      %s19 = ssub.s32 %s13, 2
      %s26 = sadd.s32 1, %s21
      %p27 = scmp.ge.s32.totalorder %s26, 1
      %s28 = scalar_select %p27, 0, %s26
      %s29 = sadd.s32 1, %s20
      %s30 = scalar_select %p27, %s29, %s20
      %p31 = scmp.ge.s32.totalorder %s30, 2
      %s32 = scalar_select %p31, 0, %s30
      %s33 = ssub.s32 %s20, %s32
      %s34 = ssub.s32 %s21, %s28
      %s35 = sor.u32 %s33, %s34
      %p36 = scmp.eq.s32.totalorder %s35, 0
      %s38 = sadd.s32 %s37, 1
      %s39 = scalar_select %p36, %s37, %s38
      %p42 = pneg %p36
      %p43 = scmp.eq.s32.totalorder %s13, 1
      %p44 = por %p42, %p43
      %p45 = scmp.ne.s32.totalorder %s37, %s40
      %p46 = scmp.eq.s32.totalorder %s13, 0
      %p47 = por %p45, %p46
      %p48 = scmp.ne.s32.totalorder %s37, %s40
      %p49 = scmp.eq.s32.totalorder %s18, 1
      %p50 = por %p48, %p49
      %p51 = scmp.ne.s32.totalorder %s40, %s41
      %p52 = scmp.eq.s32.totalorder %s18, 0
      %p53 = por %p51, %p52
      %p54 = scmp.ne.s32.totalorder %s40, %s41
      %p55 = scmp.eq.s32.totalorder %s19, 1
      %p56 = por %p54, %p55
      %p58 = scmp.ne.s32.totalorder %s41, %s57
      %p59 = scmp.eq.s32.totalorder %s19, 0
      %p60 = por %p58, %p59
      %s62 = sadd.s32 %s61, 1
      %p65 = scmp.eq.s32.totalorder %s13, 1
      %p66 = scmp.ne.s32.totalorder %s61, %s63
      %p67 = scmp.eq.s32.totalorder %s13, 0
      %p68 = por %p66, %p67
      %p69 = scmp.ne.s32.totalorder %s61, %s63
      %p70 = scmp.eq.s32.totalorder %s18, 1
      %p71 = por %p69, %p70
      %p72 = scmp.ne.s32.totalorder %s63, %s64
      %p73 = scmp.eq.s32.totalorder %s18, 0
      %p74 = por %p72, %p73
      %p75 = scmp.ne.s32.totalorder %s63, %s64
      %p76 = scmp.eq.s32.totalorder %s19, 1
      %p77 = por %p75, %p76
      %p79 = scmp.ne.s32.totalorder %s64, %s78
      %p80 = scmp.eq.s32.totalorder %s19, 0
      %p81 = por %p79, %p80
      %s83 = sadd.s32 %s82, 1
      %p86 = scmp.eq.s32.totalorder %s13, 1
      %p87 = scmp.ne.s32.totalorder %s82, %s84
      %p88 = scmp.eq.s32.totalorder %s13, 0
      %p89 = por %p87, %p88
      %p90 = scmp.ne.s32.totalorder %s82, %s84
      %p91 = scmp.eq.s32.totalorder %s18, 1
      %p92 = por %p90, %p91
      %p93 = scmp.ne.s32.totalorder %s84, %s85
      %p94 = scmp.eq.s32.totalorder %s18, 0
      %p95 = por %p93, %p94
      %p96 = scmp.ne.s32.totalorder %s84, %s85
      %p97 = scmp.eq.s32.totalorder %s19, 1
      %p98 = por %p96, %p97
      %p100 = scmp.ne.s32.totalorder %s85, %s99
      %p101 = scmp.eq.s32.totalorder %s19, 0
      %p102 = por %p100, %p101
      %s104 = sadd.s32 %s103, 1
      %p107 = scmp.eq.s32.totalorder %s13, 1
      %p108 = scmp.ne.s32.totalorder %s103, %s105
      %p109 = scmp.eq.s32.totalorder %s13, 0
      %p110 = por %p108, %p109
      %p111 = scmp.ne.s32.totalorder %s103, %s105
      %p112 = scmp.eq.s32.totalorder %s18, 1
      %p113 = por %p111, %p112
      %p114 = scmp.ne.s32.totalorder %s105, %s106
      %p115 = scmp.eq.s32.totalorder %s18, 0
      %p116 = por %p114, %p115
      %p117 = scmp.ne.s32.totalorder %s105, %s106
      %p118 = scmp.eq.s32.totalorder %s19, 1
      %p119 = por %p117, %p118
      %p121 = scmp.ne.s32.totalorder %s106, %s120
      %p122 = scmp.eq.s32.totalorder %s19, 0
      %p123 = por %p121, %p122
      %s125 = sadd.s32 %s124, 1
      %p128 = scmp.eq.s32.totalorder %s13, 1
      %p129 = scmp.ne.s32.totalorder %s124, %s126
      %p130 = scmp.eq.s32.totalorder %s13, 0
      %p131 = por %p129, %p130
      %p132 = scmp.ne.s32.totalorder %s124, %s126
      %p133 = scmp.eq.s32.totalorder %s18, 1
      %p134 = por %p132, %p133
      %p135 = scmp.ne.s32.totalorder %s126, %s127
      %p136 = scmp.eq.s32.totalorder %s18, 0
      %p137 = por %p135, %p136
      %p138 = scmp.ne.s32.totalorder %s126, %s127
      %p139 = scmp.eq.s32.totalorder %s19, 1
      %p140 = por %p138, %p139
      %p142 = scmp.ne.s32.totalorder %s127, %s141
      %p143 = scmp.eq.s32.totalorder %s19, 0
      %p144 = por %p142, %p143
      %p145 = scmp.le.s32.totalorder 1, %s13
      %p146 = scmp.lt.s32.totalorder %s13, 3
      %p147 = pnand %p145, %p146
      %p148 = pneg %p147
      // Predicated region
      $region9: #{tpu_custom_call.1} parent=5 // pred_check
        _
      $region10: #{tpu_custom_call.1} parent=5 // pred_check_branch
        %150 = sbr.rel (%p147) target = $region12
      $region11: #{tpu_custom_call.1} parent=5 // pred_region
        %s151 = ssub.s32 %s13, 1
        // Predicated region
        $region13: #{tpu_custom_call.1} parent=11 // pred_check
          %p152 = pneg %p74
        $region14: #{tpu_custom_call.1} parent=11 // pred_check_branch
          %154 = sbr.rel (%p152) target = $region16
        $region15: #{tpu_custom_call.1} parent=11 // pred_region
          _
        $region16: #{tpu_custom_call.1} parent=11 // pred_fallthru
          _
        // Predicated region
        $region17: #{tpu_custom_call.1} parent=11 // pred_check
          %p155 = pneg %p95
        $region18: #{tpu_custom_call.1} parent=11 // pred_check_branch
          %157 = sbr.rel (%p155) target = $region20
        $region19: #{tpu_custom_call.1} parent=11 // pred_region
          _
        $region20: #{tpu_custom_call.1} parent=11 // pred_fallthru
          _
        // Predicated region
        $region21: #{tpu_custom_call.1} parent=11 // pred_check
          %p158 = pneg %p116
        $region22: #{tpu_custom_call.1} parent=11 // pred_check_branch
          %160 = sbr.rel (%p158) target = $region24
        $region23: #{tpu_custom_call.1} parent=11 // pred_region
          _
        $region24: #{tpu_custom_call.1} parent=11 // pred_fallthru
          _
      $region12: #{tpu_custom_call.1} parent=5 // pred_fallthru
        _
      %p161 = scmp.lt.s32.totalorder %s13, 2
      // Predicated region
      $region25: #{tpu_custom_call.1} parent=5 // pred_check
        %p162 = pneg %p161
      $region26: #{tpu_custom_call.1} parent=5 // pred_check_branch
        %164 = sbr.rel (%p162) target = $region28
      $region27: #{tpu_custom_call.1} parent=5 // pred_region
        // Predicated region
        $region29: #{tpu_custom_call.1} parent=27 // pred_check
          %p165 = pneg %p47
        $region30: #{tpu_custom_call.1} parent=27 // pred_check_branch
          %167 = sbr.rel (%p165) target = $region32
        $region31: #{tpu_custom_call.1} parent=27 // pred_region
          %s168 = sand.u32 %s37, 1
          %s169 = scalar_lea.sflag [#allocation6], %s168
          %s170 = sand.u32 %s37, 1
          %s171 = smul.addr %s170, 256
          %s172 = scalar_lea.vmem [#allocation5], %s171
          %s173 = smul.u32 2, %s21
          %s175 = ssub.s32 4096, 4096
          %176 = vsyncadd %s169, %s175
          %s177 = smul.addr %s20, 32
          %s178 = sadd.s32 %s173, %s177
          %s179 = smul.addr %s178, 128
          %s180 = scalar_lea.hbm %s0, %s179
          %s181 = sshll.u32 %s172, 4
          %s182 = int_to_ptr.vmem [resolvable:$true] %s181
          %187 = dma.hbm_to_vmem [thread:$0]  %s180, 4096, %s182, %s169, 256, 256, 16
        $region32: #{tpu_custom_call.1} parent=27 // pred_fallthru
          _
      $region28: #{tpu_custom_call.1} parent=5 // pred_fallthru
        _
      %p188 = scmp.le.s32.totalorder 1, %s13
      %p189 = scmp.lt.s32.totalorder %s13, 3
      %p190 = pnand %p188, %p189
      %p191 = pneg %p190
      // Predicated region
      $region33: #{tpu_custom_call.1} parent=5 // pred_check
        _
      $region34: #{tpu_custom_call.1} parent=5 // pred_check_branch
        %193 = sbr.rel (%p190) target = $region36
      $region35: #{tpu_custom_call.1} parent=5 // pred_region
        %s194 = ssub.s32 %s13, 1
        %s195 = sand.u32 %s40, 1
        %s196 = scalar_lea.sflag [#allocation6], %s195
        %s197 = sand.u32 %s40, 1
        %s198 = smul.addr %s197, 256
        %s199 = scalar_lea.vmem [#allocation5], %s198
        // Predicated region
        $region37: #{tpu_custom_call.1} parent=35 // pred_check
          %p200 = pneg %p53
        $region38: #{tpu_custom_call.1} parent=35 // pred_check_branch
          %202 = sbr.rel (%p200) target = $region40
        $region39: #{tpu_custom_call.1} parent=35 // pred_region
          %203 = dma.done %s196, 4096
        $region40: #{tpu_custom_call.1} parent=35 // pred_fallthru
          _
        %s204 = sand.u32 %s40, 1
        %s205 = scalar_lea.sflag [#allocation6], %s204
        %s206 = sand.u32 %s40, 1
        %s207 = smul.addr %s206, 256
        %s208 = scalar_lea.vmem [#allocation5], %s207
        %p209 = pneg %p53
        %p210 = pneg %p50
        %p211 = pneg %p74
        %p212 = pneg %p71
        %p213 = pneg %p95
        %p214 = pneg %p92
        %p215 = pneg %p116
        %p216 = pneg %p113
        %p217 = pneg %p137
        %p218 = pneg %p134
        %s219 = smul.u32 2, %s23
        %p220 = scmp.eq.s32.totalorder %s22, 0
        %p221 = scmp.eq.s32.totalorder %s23, 0
        %p222 = pnand %p220, %p221
        %p223 = pneg %p222
        %p224 = scmp.eq.s32.totalorder %s22, 1
        %p225 = pnand %p224, %p221
        %p226 = pneg %p225
        %v227 = vld [vmem:[%s1] sm:$0xff]
        %v228 = vld [vmem:[%s1 + $0x8] sm:$0xff]
        %v229 = vld [vmem:[%s1 + $0x10] sm:$0xff]
        %v230 = vld [vmem:[%s1 + $0x18] sm:$0xff]
        %v231 = vld [vmem:[%s1 + $0x20] sm:$0xff]
        %v232 = vld [vmem:[%s1 + $0x28] sm:$0xff]
        %v233 = vld [vmem:[%s1 + $0x30] sm:$0xff]
        %v234 = vld [vmem:[%s1 + $0x38] sm:$0xff]
        %v235 = vld [vmem:[%s1 + $0x40] sm:$0xff]
        %v236 = vld [vmem:[%s1 + $0x48] sm:$0xff]
        %v237 = vld [vmem:[%s1 + $0x50] sm:$0xff]
        %v238 = vld [vmem:[%s1 + $0x58] sm:$0xff]
        %v239 = vld [vmem:[%s1 + $0x60] sm:$0xff]
        %v240 = vld [vmem:[%s1 + $0x68] sm:$0xff]
        %v241 = vld [vmem:[%s1 + $0x70] sm:$0xff]
        %v242 = vld [vmem:[%s1 + $0x78] sm:$0xff]
        // Predicated region
        $region41: #{tpu_custom_call.1} parent=35 // pred_check
          _
        $region42: #{tpu_custom_call.1} parent=35 // pred_check_branch
          %244 = sbr.rel (%p222) target = $region44
        $region43: #{tpu_custom_call.1} parent=35 // pred_region
          %245 = vst [vmem:[#allocation2] sm:$0xff] 0.0
          %246 = vst [vmem:[#allocation2 + $0x8] sm:$0xff] 0.0
          %247 = vst [vmem:[#allocation2 + $0x10] sm:$0xff] 0.0
          %248 = vst [vmem:[#allocation2 + $0x18] sm:$0xff] 0.0
          %249 = vst [vmem:[#allocation2 + $0x20] sm:$0xff] 0.0
          %250 = vst [vmem:[#allocation2 + $0x28] sm:$0xff] 0.0
          %251 = vst [vmem:[#allocation2 + $0x30] sm:$0xff] 0.0
          %252 = vst [vmem:[#allocation2 + $0x38] sm:$0xff] 0.0
          %253 = vst [vmem:[#allocation2 + $0x40] sm:$0xff] 0.0
          %254 = vst [vmem:[#allocation2 + $0x48] sm:$0xff] 0.0
          %255 = vst [vmem:[#allocation2 + $0x50] sm:$0xff] 0.0
          %256 = vst [vmem:[#allocation2 + $0x58] sm:$0xff] 0.0
          %257 = vst [vmem:[#allocation2 + $0x60] sm:$0xff] 0.0
          %258 = vst [vmem:[#allocation2 + $0x68] sm:$0xff] 0.0
          %259 = vst [vmem:[#allocation2 + $0x70] sm:$0xff] 0.0
          %260 = vst [vmem:[#allocation2 + $0x78] sm:$0xff] 0.0
          %261 = vst [vmem:[#allocation3] sm:$0xff] 0.0
          %262 = vst [vmem:[#allocation3 + $0x8] sm:$0xff] 0.0
          %263 = vst [vmem:[#allocation3 + $0x10] sm:$0xff] 0.0
          %264 = vst [vmem:[#allocation3 + $0x18] sm:$0xff] 0.0
          %265 = vst [vmem:[#allocation3 + $0x20] sm:$0xff] 0.0
          %266 = vst [vmem:[#allocation3 + $0x28] sm:$0xff] 0.0
          %267 = vst [vmem:[#allocation3 + $0x30] sm:$0xff] 0.0
          %268 = vst [vmem:[#allocation3 + $0x38] sm:$0xff] 0.0
          %269 = vst [vmem:[#allocation3 + $0x40] sm:$0xff] 0.0
          %270 = vst [vmem:[#allocation3 + $0x48] sm:$0xff] 0.0
          %271 = vst [vmem:[#allocation3 + $0x50] sm:$0xff] 0.0
          %272 = vst [vmem:[#allocation3 + $0x58] sm:$0xff] 0.0
          %273 = vst [vmem:[#allocation3 + $0x60] sm:$0xff] 0.0
          %274 = vst [vmem:[#allocation3 + $0x68] sm:$0xff] 0.0
          %275 = vst [vmem:[#allocation3 + $0x70] sm:$0xff] 0.0
          %276 = vst [vmem:[#allocation3 + $0x78] sm:$0xff] 0.0
          %vm277 = vcmask 15360
          %278 = vst.msk [vmem:[%s4] sm:$0xff] %vm277, 0.0
          %279 = vst.msk [vmem:[%s4 + $0x8] sm:$0xff] %vm277, 0.0
          %280 = vst.msk [vmem:[%s4 + $0x10] sm:$0xff] %vm277, 0.0
          %281 = vst.msk [vmem:[%s4 + $0x18] sm:$0xff] %vm277, 0.0
          %282 = vst.msk [vmem:[%s4 + $0x20] sm:$0xff] %vm277, 0.0
          %283 = vst.msk [vmem:[%s4 + $0x28] sm:$0xff] %vm277, 0.0
          %284 = vst.msk [vmem:[%s4 + $0x30] sm:$0xff] %vm277, 0.0
          %285 = vst.msk [vmem:[%s4 + $0x38] sm:$0xff] %vm277, 0.0
          %286 = vst.msk [vmem:[%s4 + $0x40] sm:$0xff] %vm277, 0.0
          %287 = vst.msk [vmem:[%s4 + $0x48] sm:$0xff] %vm277, 0.0
          %288 = vst.msk [vmem:[%s4 + $0x50] sm:$0xff] %vm277, 0.0
          %289 = vst.msk [vmem:[%s4 + $0x58] sm:$0xff] %vm277, 0.0
          %290 = vst.msk [vmem:[%s4 + $0x60] sm:$0xff] %vm277, 0.0
          %291 = vst.msk [vmem:[%s4 + $0x68] sm:$0xff] %vm277, 0.0
          %292 = vst.msk [vmem:[%s4 + $0x70] sm:$0xff] %vm277, 0.0
          %293 = vst.msk [vmem:[%s4 + $0x78] sm:$0xff] %vm277, 0.0
          %v294 = vld [vmem:[%s199] sm:$0xff]
          %v295 = vld [vmem:[%s199 + $0x10] sm:$0xff]
          %v296 = vld [vmem:[%s199 + $0x20] sm:$0xff]
          %v297 = vld [vmem:[%s199 + $0x30] sm:$0xff]
          %v298 = vld [vmem:[%s199 + $0x40] sm:$0xff]
          %v299 = vld [vmem:[%s199 + $0x50] sm:$0xff]
          %v300 = vld [vmem:[%s199 + $0x60] sm:$0xff]
          %v301 = vld [vmem:[%s199 + $0x70] sm:$0xff]
          %v302 = vld [vmem:[%s199 + $0x80] sm:$0xff]
          %v303 = vld [vmem:[%s199 + $0x90] sm:$0xff]
          %v304 = vld [vmem:[%s199 + $0xa0] sm:$0xff]
          %v305 = vld [vmem:[%s199 + $0xb0] sm:$0xff]
          %v306 = vld [vmem:[%s199 + $0xc0] sm:$0xff]
          %v307 = vld [vmem:[%s199 + $0xd0] sm:$0xff]
          %v308 = vld [vmem:[%s199 + $0xe0] sm:$0xff]
          %v309 = vld [vmem:[%s199 + $0xf0] sm:$0xff]
          %310 = vmatprep.subr.mxu0 0.0
          %311 = vmatpush1.msra.mxu0 %v294
          %312 = vmatprep.subr.mxu0 0.0
          %313 = vmatpush1.msra.mxu0 %v295
          %314 = vmatprep.subr.mxu0 0.0
          %315 = vmatpush1.msra.mxu0 %v296
          %316 = vmatprep.subr.mxu0 0.0
          %317 = vmatpush1.msra.mxu0 %v297
          %318 = vmatprep.subr.mxu0 0.0
          %319 = vmatpush1.msra.mxu0 %v298
          %320 = vmatprep.subr.mxu0 0.0
          %321 = vmatpush1.msra.mxu0 %v299
          %322 = vmatprep.subr.mxu0 0.0
          %323 = vmatpush1.msra.mxu0 %v300
          %324 = vmatprep.subr.mxu0 0.0
          %325 = vmatpush1.msra.mxu0 %v301
          %326 = vmatprep.subr.mxu0 0.0
          %327 = vmatpush1.msra.mxu0 %v302
          %328 = vmatprep.subr.mxu0 0.0
          %329 = vmatpush1.msra.mxu0 %v303
          %330 = vmatprep.subr.mxu0 0.0
          %331 = vmatpush1.msra.mxu0 %v304
          %332 = vmatprep.subr.mxu0 0.0
          %333 = vmatpush1.msra.mxu0 %v305
          %334 = vmatprep.subr.mxu0 0.0
          %335 = vmatpush1.msra.mxu0 %v306
          %336 = vmatprep.subr.mxu0 0.0
          %337 = vmatpush1.msra.mxu0 %v307
          %338 = vmatprep.subr.mxu0 0.0
          %339 = vmatpush1.msra.mxu0 %v308
          %340 = vmatprep.subr.mxu0 0.0
          %341 = vmatpush1.msra.mxu0 %v309
          %342 = vmatprep.subr.mxu0 0.0
          %343 = vmatpush1.msra.mxu0 0.0
          %344 = vmatprep.subr.mxu0 0.0
          %345 = vmatpush1.msra.mxu0 0.0
          %346 = vmatprep.subr.mxu0 0.0
          %347 = vmatpush1.msra.mxu0 0.0
          %348 = vmatprep.subr.mxu0 0.0
          %349 = vmatpush1.msra.mxu0 0.0
          %350 = vmatprep.subr.mxu0 0.0
          %351 = vmatpush1.msra.mxu0 0.0
          %352 = vmatprep.subr.mxu0 0.0
          %353 = vmatpush1.msra.mxu0 0.0
          %354 = vmatprep.subr.mxu0 0.0
          %355 = vmatpush1.msra.mxu0 0.0
          %356 = vmatprep.subr.mxu0 0.0
          %357 = vmatpush1.msra.mxu0 0.0
          %358 = vmatprep.subr.mxu0 0.0
          %359 = vmatpush1.msra.mxu0 0.0
          %360 = vmatprep.subr.mxu0 0.0
          %361 = vmatpush1.msra.mxu0 0.0
          %362 = vmatprep.subr.mxu0 0.0
          %363 = vmatpush1.msra.mxu0 0.0
          %364 = vmatprep.subr.mxu0 0.0
          %365 = vmatpush1.msra.mxu0 0.0
          %366 = vmatprep.subr.mxu0 0.0
          %367 = vmatpush1.msra.mxu0 0.0
          %368 = vmatprep.subr.mxu0 0.0
          %369 = vmatpush1.msra.mxu0 0.0
          %370 = vmatprep.subr.mxu0 0.0
          %371 = vmatpush1.msra.mxu0 0.0
          %372 = vmatprep.subr.mxu0 0.0
          %373 = vmatpush1.msra.mxu0 0.0
          %374 = vmatprep.mubr.f32.mxu0 0.0
          %375 = vmatmul.mubr.f32.gmra.mrb[0].mxu0 %v227
          %v376 = vpop.f32.mrb[0].mxu0
          %v377 = vadd.f32 0.0, %v376
          %v378 = vpop.f32.mrb[0].mxu0
          %379 = vmatprep.mubr.f32.mxu0 0.0
          %380 = vmatmul.mubr.f32.gmra.mrb[0].mxu0 %v228
          %v381 = vpop.f32.mrb[0].mxu0
          %v382 = vadd.f32 0.0, %v381
          %v383 = vpop.f32.mrb[0].mxu0
          %384 = vmatprep.mubr.f32.mxu0 0.0
          %385 = vmatmul.mubr.f32.gmra.mrb[0].mxu0 %v229
          %v386 = vpop.f32.mrb[0].mxu0
          %v387 = vadd.f32 0.0, %v386
          %v388 = vpop.f32.mrb[0].mxu0
          %389 = vmatprep.mubr.f32.mxu0 0.0
          %390 = vmatmul.mubr.f32.gmra.mrb[0].mxu0 %v230
          %v391 = vpop.f32.mrb[0].mxu0
          %v392 = vadd.f32 0.0, %v391
          %v393 = vpop.f32.mrb[0].mxu0
          %394 = vmatprep.mubr.f32.mxu0 0.0
          %395 = vmatmul.mubr.f32.gmra.mrb[0].mxu0 %v231
          %v396 = vpop.f32.mrb[0].mxu0
          %v397 = vadd.f32 0.0, %v396
          %v398 = vpop.f32.mrb[0].mxu0
          %399 = vmatprep.mubr.f32.mxu0 0.0
          %400 = vmatmul.mubr.f32.gmra.mrb[0].mxu0 %v232
          %v401 = vpop.f32.mrb[0].mxu0
          %v402 = vadd.f32 0.0, %v401
          %v403 = vpop.f32.mrb[0].mxu0
          %404 = vmatprep.mubr.f32.mxu0 0.0
          %405 = vmatmul.mubr.f32.gmra.mrb[0].mxu0 %v233
          %v406 = vpop.f32.mrb[0].mxu0
          %v407 = vadd.f32 0.0, %v406
          %v408 = vpop.f32.mrb[0].mxu0
          %409 = vmatprep.mubr.f32.mxu0 0.0
          %410 = vmatmul.mubr.f32.gmra.mrb[0].mxu0 %v234
          %v411 = vpop.f32.mrb[0].mxu0
          %v412 = vadd.f32 0.0, %v411
          %v413 = vpop.f32.mrb[0].mxu0
          %414 = vmatprep.mubr.f32.mxu0 0.0
          %415 = vmatmul.mubr.f32.gmra.mrb[0].mxu0 %v235
          %v416 = vpop.f32.mrb[0].mxu0
          %v417 = vadd.f32 0.0, %v416
          %v418 = vpop.f32.mrb[0].mxu0
          %419 = vmatprep.mubr.f32.mxu0 0.0
          %420 = vmatmul.mubr.f32.gmra.mrb[0].mxu0 %v236
          %v421 = vpop.f32.mrb[0].mxu0
          %v422 = vadd.f32 0.0, %v421
          %v423 = vpop.f32.mrb[0].mxu0
          %424 = vmatprep.mubr.f32.mxu0 0.0
          %425 = vmatmul.mubr.f32.gmra.mrb[0].mxu0 %v237
          %v426 = vpop.f32.mrb[0].mxu0
          %v427 = vadd.f32 0.0, %v426
          %v428 = vpop.f32.mrb[0].mxu0
          %429 = vmatprep.mubr.f32.mxu0 0.0
          %430 = vmatmul.mubr.f32.gmra.mrb[0].mxu0 %v238
          %v431 = vpop.f32.mrb[0].mxu0
          %v432 = vadd.f32 0.0, %v431
          %v433 = vpop.f32.mrb[0].mxu0
          %434 = vmatprep.mubr.f32.mxu0 0.0
          %435 = vmatmul.mubr.f32.gmra.mrb[0].mxu0 %v239
          %v436 = vpop.f32.mrb[0].mxu0
          %v437 = vadd.f32 0.0, %v436
          %v438 = vpop.f32.mrb[0].mxu0
          %439 = vmatprep.mubr.f32.mxu0 0.0
          %440 = vmatmul.mubr.f32.gmra.mrb[0].mxu0 %v240
          %v441 = vpop.f32.mrb[0].mxu0
          %v442 = vadd.f32 0.0, %v441
          %v443 = vpop.f32.mrb[0].mxu0
          %444 = vmatprep.mubr.f32.mxu0 0.0
          %445 = vmatmul.mubr.f32.gmra.mrb[0].mxu0 %v241
          %v446 = vpop.f32.mrb[0].mxu0
          %v447 = vadd.f32 0.0, %v446
          %v448 = vpop.f32.mrb[0].mxu0
          %449 = vmatprep.mubr.f32.mxu0 0.0
          %450 = vmatmul.mubr.f32.gmra.mrb[0].mxu0 %v242
          %v451 = vpop.f32.mrb[0].mxu0
          %v452 = vadd.f32 0.0, %v451
          %v453 = vpop.f32.mrb[0].mxu0
          %454 = vdwg.mxu0
          %vm455 = vcmask 7168
          %456 = vst.msk [vmem:[#allocation4] sm:$0xff] %vm455, %v377
          %457 = vst.msk [vmem:[#allocation4 + $0x8] sm:$0xff] %vm455, %v382
          %458 = vst.msk [vmem:[#allocation4 + $0x10] sm:$0xff] %vm455, %v387
          %459 = vst.msk [vmem:[#allocation4 + $0x18] sm:$0xff] %vm455, %v392
          %460 = vst.msk [vmem:[#allocation4 + $0x20] sm:$0xff] %vm455, %v397
          %461 = vst.msk [vmem:[#allocation4 + $0x28] sm:$0xff] %vm455, %v402
          %462 = vst.msk [vmem:[#allocation4 + $0x30] sm:$0xff] %vm455, %v407
          %463 = vst.msk [vmem:[#allocation4 + $0x38] sm:$0xff] %vm455, %v412
          %464 = vst.msk [vmem:[#allocation4 + $0x40] sm:$0xff] %vm455, %v417
          %465 = vst.msk [vmem:[#allocation4 + $0x48] sm:$0xff] %vm455, %v422
          %466 = vst.msk [vmem:[#allocation4 + $0x50] sm:$0xff] %vm455, %v427
          %467 = vst.msk [vmem:[#allocation4 + $0x58] sm:$0xff] %vm455, %v432
          %468 = vst.msk [vmem:[#allocation4 + $0x60] sm:$0xff] %vm455, %v437
          %469 = vst.msk [vmem:[#allocation4 + $0x68] sm:$0xff] %vm455, %v442
          %470 = vst.msk [vmem:[#allocation4 + $0x70] sm:$0xff] %vm455, %v447
          %471 = vst.msk [vmem:[#allocation4 + $0x78] sm:$0xff] %vm455, %v452
        $region44: #{tpu_custom_call.1} parent=35 // pred_fallthru
          _
        %v472 = vld [vmem:[#allocation4] sm:$0xff]
        %v473 = vld [vmem:[#allocation4 + $0x8] sm:$0xff]
        %v474 = vld [vmem:[#allocation4 + $0x10] sm:$0xff]
        %v475 = vld [vmem:[#allocation4 + $0x18] sm:$0xff]
        %v476 = vld [vmem:[#allocation4 + $0x20] sm:$0xff]
        %v477 = vld [vmem:[#allocation4 + $0x28] sm:$0xff]
        %v478 = vld [vmem:[#allocation4 + $0x30] sm:$0xff]
        %v479 = vld [vmem:[#allocation4 + $0x38] sm:$0xff]
        %v480 = vld [vmem:[#allocation4 + $0x40] sm:$0xff]
        %v481 = vld [vmem:[#allocation4 + $0x48] sm:$0xff]
        %v482 = vld [vmem:[#allocation4 + $0x50] sm:$0xff]
        %v483 = vld [vmem:[#allocation4 + $0x58] sm:$0xff]
        %v484 = vld [vmem:[#allocation4 + $0x60] sm:$0xff]
        %v485 = vld [vmem:[#allocation4 + $0x68] sm:$0xff]
        %v486 = vld [vmem:[#allocation4 + $0x70] sm:$0xff]
        %v487 = vld [vmem:[#allocation4 + $0x78] sm:$0xff]
        %p488 = scmp.ne.s32.totalorder %s23, 0
        // Predicated region
        $region45: #{tpu_custom_call.1} parent=35 // pred_check
          %p489 = pneg %p488
        $region46: #{tpu_custom_call.1} parent=35 // pred_check_branch
          %491 = sbr.rel (%p489) target = $region48
        $region47: #{tpu_custom_call.1} parent=35 // pred_region
          %v492 = vld [vmem:[%s199] sm:$0xff]
          %v493 = vld [vmem:[%s199 + $0x8] sm:$0xff]
          %v494 = vld [vmem:[%s199 + $0x10] sm:$0xff]
          %v495 = vld [vmem:[%s199 + $0x18] sm:$0xff]
          %v496 = vld [vmem:[%s199 + $0x20] sm:$0xff]
          %v497 = vld [vmem:[%s199 + $0x28] sm:$0xff]
          %v498 = vld [vmem:[%s199 + $0x30] sm:$0xff]
          %v499 = vld [vmem:[%s199 + $0x38] sm:$0xff]
          %v500 = vld [vmem:[%s199 + $0x40] sm:$0xff]
          %v501 = vld [vmem:[%s199 + $0x48] sm:$0xff]
          %v502 = vld [vmem:[%s199 + $0x50] sm:$0xff]
          %v503 = vld [vmem:[%s199 + $0x58] sm:$0xff]
          %v504 = vld [vmem:[%s199 + $0x60] sm:$0xff]
          %v505 = vld [vmem:[%s199 + $0x68] sm:$0xff]
          %v506 = vld [vmem:[%s199 + $0x70] sm:$0xff]
          %v507 = vld [vmem:[%s199 + $0x78] sm:$0xff]
          %v508 = vld [vmem:[%s199 + $0x80] sm:$0xff]
          %v509 = vld [vmem:[%s199 + $0x88] sm:$0xff]
          %v510 = vld [vmem:[%s199 + $0x90] sm:$0xff]
          %v511 = vld [vmem:[%s199 + $0x98] sm:$0xff]
          %v512 = vld [vmem:[%s199 + $0xa0] sm:$0xff]
          %v513 = vld [vmem:[%s199 + $0xa8] sm:$0xff]
          %v514 = vld [vmem:[%s199 + $0xb0] sm:$0xff]
          %v515 = vld [vmem:[%s199 + $0xb8] sm:$0xff]
          %v516 = vld [vmem:[%s199 + $0xc0] sm:$0xff]
          %v517 = vld [vmem:[%s199 + $0xc8] sm:$0xff]
          %v518 = vld [vmem:[%s199 + $0xd0] sm:$0xff]
          %v519 = vld [vmem:[%s199 + $0xd8] sm:$0xff]
          %v520 = vld [vmem:[%s199 + $0xe0] sm:$0xff]
          %v521 = vld [vmem:[%s199 + $0xe8] sm:$0xff]
          %v522 = vld [vmem:[%s199 + $0xf0] sm:$0xff]
          %v523 = vld [vmem:[%s199 + $0xf8] sm:$0xff]
          %524 = vmatprep.subr.mxu0 %v493
          %525 = vmatpush1.msra.mxu0 %v492
          %526 = vmatprep.subr.mxu0 %v495
          %527 = vmatpush1.msra.mxu0 %v494
          %528 = vmatprep.subr.mxu0 %v497
          %529 = vmatpush1.msra.mxu0 %v496
          %530 = vmatprep.subr.mxu0 %v499
          %531 = vmatpush1.msra.mxu0 %v498
          %532 = vmatprep.subr.mxu0 %v501
          %533 = vmatpush1.msra.mxu0 %v500
          %534 = vmatprep.subr.mxu0 %v503
          %535 = vmatpush1.msra.mxu0 %v502
          %536 = vmatprep.subr.mxu0 %v505
          %537 = vmatpush1.msra.mxu0 %v504
          %538 = vmatprep.subr.mxu0 %v507
          %539 = vmatpush1.msra.mxu0 %v506
          %540 = vmatprep.subr.mxu0 %v509
          %541 = vmatpush1.msra.mxu0 %v508
          %542 = vmatprep.subr.mxu0 %v511
          %543 = vmatpush1.msra.mxu0 %v510
          %544 = vmatprep.subr.mxu0 %v513
          %545 = vmatpush1.msra.mxu0 %v512
          %546 = vmatprep.subr.mxu0 %v515
          %547 = vmatpush1.msra.mxu0 %v514
          %548 = vmatprep.subr.mxu0 %v517
          %549 = vmatpush1.msra.mxu0 %v516
          %550 = vmatprep.subr.mxu0 %v519
          %551 = vmatpush1.msra.mxu0 %v518
          %552 = vmatprep.subr.mxu0 %v521
          %553 = vmatpush1.msra.mxu0 %v520
          %554 = vmatprep.subr.mxu0 %v523
          %555 = vmatpush1.msra.mxu0 %v522
          %556 = vmatprep.subr.mxu0 0.0
          %557 = vmatpush1.msra.mxu0 0.0
          %558 = vmatprep.subr.mxu0 0.0
          %559 = vmatpush1.msra.mxu0 0.0
          %560 = vmatprep.subr.mxu0 0.0
          %561 = vmatpush1.msra.mxu0 0.0
          %562 = vmatprep.subr.mxu0 0.0
          %563 = vmatpush1.msra.mxu0 0.0
          %564 = vmatprep.subr.mxu0 0.0
          %565 = vmatpush1.msra.mxu0 0.0
          %566 = vmatprep.subr.mxu0 0.0
          %567 = vmatpush1.msra.mxu0 0.0
          %568 = vmatprep.subr.mxu0 0.0
          %569 = vmatpush1.msra.mxu0 0.0
          %570 = vmatprep.subr.mxu0 0.0
          %571 = vmatpush1.msra.mxu0 0.0
          %572 = vmatprep.subr.mxu0 0.0
          %573 = vmatpush1.msra.mxu0 0.0
          %574 = vmatprep.subr.mxu0 0.0
          %575 = vmatpush1.msra.mxu0 0.0
          %576 = vmatprep.subr.mxu0 0.0
          %577 = vmatpush1.msra.mxu0 0.0
          %578 = vmatprep.subr.mxu0 0.0
          %579 = vmatpush1.msra.mxu0 0.0
          %580 = vmatprep.subr.mxu0 0.0
          %581 = vmatpush1.msra.mxu0 0.0
          %582 = vmatprep.subr.mxu0 0.0
          %583 = vmatpush1.msra.mxu0 0.0
          %584 = vmatprep.subr.mxu0 0.0
          %585 = vmatpush1.msra.mxu0 0.0
          %586 = vmatprep.subr.mxu0 0.0
          %587 = vmatpush1.msra.mxu0 0.0
          %588 = vmatprep.mubr.f32.mxu0 0.0
          %589 = vmatmul.mubr.f32.gmra.mrb[0].mxu0 %v227
          %v590 = vpop.f32.mrb[0].mxu0
          %v591 = vadd.f32 0.0, %v590
          %v592 = vpop.f32.mrb[0].mxu0
          %v593 = vadd.f32 0.0, %v592
          %594 = vmatprep.mubr.f32.mxu0 0.0
          %595 = vmatmul.mubr.f32.gmra.mrb[0].mxu0 %v228
          %v596 = vpop.f32.mrb[0].mxu0
          %v597 = vadd.f32 0.0, %v596
          %v598 = vpop.f32.mrb[0].mxu0
          %v599 = vadd.f32 0.0, %v598
          %600 = vmatprep.mubr.f32.mxu0 0.0
          %601 = vmatmul.mubr.f32.gmra.mrb[0].mxu0 %v229
          %v602 = vpop.f32.mrb[0].mxu0
          %v603 = vadd.f32 0.0, %v602
          %v604 = vpop.f32.mrb[0].mxu0
          %v605 = vadd.f32 0.0, %v604
          %606 = vmatprep.mubr.f32.mxu0 0.0
          %607 = vmatmul.mubr.f32.gmra.mrb[0].mxu0 %v230
          %v608 = vpop.f32.mrb[0].mxu0
          %v609 = vadd.f32 0.0, %v608
          %v610 = vpop.f32.mrb[0].mxu0
          %v611 = vadd.f32 0.0, %v610
          %612 = vmatprep.mubr.f32.mxu0 0.0
          %613 = vmatmul.mubr.f32.gmra.mrb[0].mxu0 %v231
          %v614 = vpop.f32.mrb[0].mxu0
          %v615 = vadd.f32 0.0, %v614
          %v616 = vpop.f32.mrb[0].mxu0
          %v617 = vadd.f32 0.0, %v616
          %618 = vmatprep.mubr.f32.mxu0 0.0
          %619 = vmatmul.mubr.f32.gmra.mrb[0].mxu0 %v232
          %v620 = vpop.f32.mrb[0].mxu0
          %v621 = vadd.f32 0.0, %v620
          %v622 = vpop.f32.mrb[0].mxu0
          %v623 = vadd.f32 0.0, %v622
          %624 = vmatprep.mubr.f32.mxu0 0.0
          %625 = vmatmul.mubr.f32.gmra.mrb[0].mxu0 %v233
          %v626 = vpop.f32.mrb[0].mxu0
          %v627 = vadd.f32 0.0, %v626
          %v628 = vpop.f32.mrb[0].mxu0
          %v629 = vadd.f32 0.0, %v628
          %630 = vmatprep.mubr.f32.mxu0 0.0
          %631 = vmatmul.mubr.f32.gmra.mrb[0].mxu0 %v234
          %v632 = vpop.f32.mrb[0].mxu0
          %v633 = vadd.f32 0.0, %v632
          %v634 = vpop.f32.mrb[0].mxu0
          %v635 = vadd.f32 0.0, %v634
          %636 = vmatprep.mubr.f32.mxu0 0.0
          %637 = vmatmul.mubr.f32.gmra.mrb[0].mxu0 %v235
          %v638 = vpop.f32.mrb[0].mxu0
          %v639 = vadd.f32 0.0, %v638
          %v640 = vpop.f32.mrb[0].mxu0
          %v641 = vadd.f32 0.0, %v640
          %642 = vmatprep.mubr.f32.mxu0 0.0
          %643 = vmatmul.mubr.f32.gmra.mrb[0].mxu0 %v236
          %v644 = vpop.f32.mrb[0].mxu0
          %v645 = vadd.f32 0.0, %v644
          %v646 = vpop.f32.mrb[0].mxu0
          %v647 = vadd.f32 0.0, %v646
          %648 = vmatprep.mubr.f32.mxu0 0.0
          %649 = vmatmul.mubr.f32.gmra.mrb[0].mxu0 %v237
          %v650 = vpop.f32.mrb[0].mxu0
          %v651 = vadd.f32 0.0, %v650
          %v652 = vpop.f32.mrb[0].mxu0
          %v653 = vadd.f32 0.0, %v652
          %654 = vmatprep.mubr.f32.mxu0 0.0
          %655 = vmatmul.mubr.f32.gmra.mrb[0].mxu0 %v238
          %v656 = vpop.f32.mrb[0].mxu0
          %v657 = vadd.f32 0.0, %v656
          %v658 = vpop.f32.mrb[0].mxu0
          %v659 = vadd.f32 0.0, %v658
          %660 = vmatprep.mubr.f32.mxu0 0.0
          %661 = vmatmul.mubr.f32.gmra.mrb[0].mxu0 %v239
          %v662 = vpop.f32.mrb[0].mxu0
          %v663 = vadd.f32 0.0, %v662
          %v664 = vpop.f32.mrb[0].mxu0
          %v665 = vadd.f32 0.0, %v664
          %666 = vmatprep.mubr.f32.mxu0 0.0
          %667 = vmatmul.mubr.f32.gmra.mrb[0].mxu0 %v240
          %v668 = vpop.f32.mrb[0].mxu0
          %v669 = vadd.f32 0.0, %v668
          %v670 = vpop.f32.mrb[0].mxu0
          %v671 = vadd.f32 0.0, %v670
          %672 = vmatprep.mubr.f32.mxu0 0.0
          %673 = vmatmul.mubr.f32.gmra.mrb[0].mxu0 %v241
          %v674 = vpop.f32.mrb[0].mxu0
          %v675 = vadd.f32 0.0, %v674
          %v676 = vpop.f32.mrb[0].mxu0
          %v677 = vadd.f32 0.0, %v676
          %678 = vmatprep.mubr.f32.mxu0 0.0
          %679 = vmatmul.mubr.f32.gmra.mrb[0].mxu0 %v242
          %v680 = vpop.f32.mrb[0].mxu0
          %v681 = vadd.f32 0.0, %v680
          %v682 = vpop.f32.mrb[0].mxu0
          %v683 = vadd.f32 0.0, %v682
          %684 = vdwg.mxu0
          %686 = vset.pattern.permute.xlu0 0
          %687 = vperm.xlu0 %686, %v472
          %v688 = vpop.permute.xlu0 %687
          %691 = vset.pattern.permute.xlu0 0
          %692 = vperm.xlu0 %691, %v473
          %v693 = vpop.permute.xlu0 %692
          %696 = vset.pattern.permute.xlu0 0
          %697 = vperm.xlu0 %696, %v474
          %v698 = vpop.permute.xlu0 %697
          %701 = vset.pattern.permute.xlu0 0
          %702 = vperm.xlu0 %701, %v475
          %v703 = vpop.permute.xlu0 %702
          %706 = vset.pattern.permute.xlu0 0
          %707 = vperm.xlu0 %706, %v476
          %v708 = vpop.permute.xlu0 %707
          %711 = vset.pattern.permute.xlu0 0
          %712 = vperm.xlu0 %711, %v477
          %v713 = vpop.permute.xlu0 %712
          %716 = vset.pattern.permute.xlu0 0
          %717 = vperm.xlu0 %716, %v478
          %v718 = vpop.permute.xlu0 %717
          %721 = vset.pattern.permute.xlu0 0
          %722 = vperm.xlu0 %721, %v479
          %v723 = vpop.permute.xlu0 %722
          %726 = vset.pattern.permute.xlu0 0
          %727 = vperm.xlu0 %726, %v480
          %v728 = vpop.permute.xlu0 %727
          %731 = vset.pattern.permute.xlu0 0
          %732 = vperm.xlu0 %731, %v481
          %v733 = vpop.permute.xlu0 %732
          %736 = vset.pattern.permute.xlu0 0
          %737 = vperm.xlu0 %736, %v482
          %v738 = vpop.permute.xlu0 %737
          %741 = vset.pattern.permute.xlu0 0
          %742 = vperm.xlu0 %741, %v483
          %v743 = vpop.permute.xlu0 %742
          %746 = vset.pattern.permute.xlu0 0
          %747 = vperm.xlu0 %746, %v484
          %v748 = vpop.permute.xlu0 %747
          %751 = vset.pattern.permute.xlu0 0
          %752 = vperm.xlu0 %751, %v485
          %v753 = vpop.permute.xlu0 %752
          %756 = vset.pattern.permute.xlu0 0
          %757 = vperm.xlu0 %756, %v486
          %v758 = vpop.permute.xlu0 %757
          %761 = vset.pattern.permute.xlu0 0
          %762 = vperm.xlu0 %761, %v487
          %v763 = vpop.permute.xlu0 %762
          %v765 = vsub.f32 %v591, %v688
          %v766 = vsub.f32 %v593, %v688
          %v767 = vsub.f32 %v597, %v693
          %v768 = vsub.f32 %v599, %v693
          %v769 = vsub.f32 %v603, %v698
          %v770 = vsub.f32 %v605, %v698
          %v771 = vsub.f32 %v609, %v703
          %v772 = vsub.f32 %v611, %v703
          %v773 = vsub.f32 %v615, %v708
          %v774 = vsub.f32 %v617, %v708
          %v775 = vsub.f32 %v621, %v713
          %v776 = vsub.f32 %v623, %v713
          %v777 = vsub.f32 %v627, %v718
          %v778 = vsub.f32 %v629, %v718
          %v779 = vsub.f32 %v633, %v723
          %v780 = vsub.f32 %v635, %v723
          %v781 = vsub.f32 %v639, %v728
          %v782 = vsub.f32 %v641, %v728
          %v783 = vsub.f32 %v645, %v733
          %v784 = vsub.f32 %v647, %v733
          %v785 = vsub.f32 %v651, %v738
          %v786 = vsub.f32 %v653, %v738
          %v787 = vsub.f32 %v657, %v743
          %v788 = vsub.f32 %v659, %v743
          %v789 = vsub.f32 %v663, %v748
          %v790 = vsub.f32 %v665, %v748
          %v791 = vsub.f32 %v669, %v753
          %v792 = vsub.f32 %v671, %v753
          %v793 = vsub.f32 %v675, %v758
          %v794 = vsub.f32 %v677, %v758
          %v795 = vsub.f32 %v681, %v763
          %v796 = vsub.f32 %v683, %v763
          %v797 = vmul.f32 %v765, %v765
          %v798 = vmul.f32 %v766, %v766
          %v799 = vmul.f32 %v767, %v767
          %v800 = vmul.f32 %v768, %v768
          %v801 = vmul.f32 %v769, %v769
          %v802 = vmul.f32 %v770, %v770
          %v803 = vmul.f32 %v771, %v771
          %v804 = vmul.f32 %v772, %v772
          %v805 = vmul.f32 %v773, %v773
          %v806 = vmul.f32 %v774, %v774
          %v807 = vmul.f32 %v775, %v775
          %v808 = vmul.f32 %v776, %v776
          %v809 = vmul.f32 %v777, %v777
          %v810 = vmul.f32 %v778, %v778
          %v811 = vmul.f32 %v779, %v779
          %v812 = vmul.f32 %v780, %v780
          %v813 = vmul.f32 %v781, %v781
          %v814 = vmul.f32 %v782, %v782
          %v815 = vmul.f32 %v783, %v783
          %v816 = vmul.f32 %v784, %v784
          %v817 = vmul.f32 %v785, %v785
          %v818 = vmul.f32 %v786, %v786
          %v819 = vmul.f32 %v787, %v787
          %v820 = vmul.f32 %v788, %v788
          %v821 = vmul.f32 %v789, %v789
          %v822 = vmul.f32 %v790, %v790
          %v823 = vmul.f32 %v791, %v791
          %v824 = vmul.f32 %v792, %v792
          %v825 = vmul.f32 %v793, %v793
          %v826 = vmul.f32 %v794, %v794
          %v827 = vmul.f32 %v795, %v795
          %v828 = vmul.f32 %v796, %v796
          %v829 = vadd.f32 %v591, %v593
          %v830 = vadd.f32 %v597, %v599
          %v831 = vadd.f32 %v603, %v605
          %v832 = vadd.f32 %v609, %v611
          %v833 = vadd.f32 %v615, %v617
          %v834 = vadd.f32 %v621, %v623
          %v835 = vadd.f32 %v627, %v629
          %v836 = vadd.f32 %v633, %v635
          %v837 = vadd.f32 %v639, %v641
          %v838 = vadd.f32 %v645, %v647
          %v839 = vadd.f32 %v651, %v653
          %v840 = vadd.f32 %v657, %v659
          %v841 = vadd.f32 %v663, %v665
          %v842 = vadd.f32 %v669, %v671
          %v843 = vadd.f32 %v675, %v677
          %v844 = vadd.f32 %v681, %v683
          %v845 = vadd.f32 %v797, %v798
          %v846 = vadd.f32 %v799, %v800
          %v847 = vadd.f32 %v801, %v802
          %v848 = vadd.f32 %v803, %v804
          %v849 = vadd.f32 %v805, %v806
          %v850 = vadd.f32 %v807, %v808
          %v851 = vadd.f32 %v809, %v810
          %v852 = vadd.f32 %v811, %v812
          %v853 = vadd.f32 %v813, %v814
          %v854 = vadd.f32 %v815, %v816
          %v855 = vadd.f32 %v817, %v818
          %v856 = vadd.f32 %v819, %v820
          %v857 = vadd.f32 %v821, %v822
          %v858 = vadd.f32 %v823, %v824
          %v859 = vadd.f32 %v825, %v826
          %v860 = vadd.f32 %v827, %v828
          %v861 = vld [vmem:[#allocation2] sm:$0xff]
          %v862 = vld [vmem:[#allocation2 + $0x8] sm:$0xff]
          %v863 = vld [vmem:[#allocation2 + $0x10] sm:$0xff]
          %v864 = vld [vmem:[#allocation2 + $0x18] sm:$0xff]
          %v865 = vld [vmem:[#allocation2 + $0x20] sm:$0xff]
          %v866 = vld [vmem:[#allocation2 + $0x28] sm:$0xff]
          %v867 = vld [vmem:[#allocation2 + $0x30] sm:$0xff]
          %v868 = vld [vmem:[#allocation2 + $0x38] sm:$0xff]
          %v869 = vld [vmem:[#allocation2 + $0x40] sm:$0xff]
          %v870 = vld [vmem:[#allocation2 + $0x48] sm:$0xff]
          %v871 = vld [vmem:[#allocation2 + $0x50] sm:$0xff]
          %v872 = vld [vmem:[#allocation2 + $0x58] sm:$0xff]
          %v873 = vld [vmem:[#allocation2 + $0x60] sm:$0xff]
          %v874 = vld [vmem:[#allocation2 + $0x68] sm:$0xff]
          %v875 = vld [vmem:[#allocation2 + $0x70] sm:$0xff]
          %v876 = vld [vmem:[#allocation2 + $0x78] sm:$0xff]
          %v877 = vadd.f32 %v861, %v829
          %v878 = vadd.f32 %v862, %v830
          %v879 = vadd.f32 %v863, %v831
          %v880 = vadd.f32 %v864, %v832
          %v881 = vadd.f32 %v865, %v833
          %v882 = vadd.f32 %v866, %v834
          %v883 = vadd.f32 %v867, %v835
          %v884 = vadd.f32 %v868, %v836
          %v885 = vadd.f32 %v869, %v837
          %v886 = vadd.f32 %v870, %v838
          %v887 = vadd.f32 %v871, %v839
          %v888 = vadd.f32 %v872, %v840
          %v889 = vadd.f32 %v873, %v841
          %v890 = vadd.f32 %v874, %v842
          %v891 = vadd.f32 %v875, %v843
          %v892 = vadd.f32 %v876, %v844
          %893 = vst [vmem:[#allocation2] sm:$0xff] %v877
          %894 = vst [vmem:[#allocation2 + $0x8] sm:$0xff] %v878
          %895 = vst [vmem:[#allocation2 + $0x10] sm:$0xff] %v879
          %896 = vst [vmem:[#allocation2 + $0x18] sm:$0xff] %v880
          %897 = vst [vmem:[#allocation2 + $0x20] sm:$0xff] %v881
          %898 = vst [vmem:[#allocation2 + $0x28] sm:$0xff] %v882
          %899 = vst [vmem:[#allocation2 + $0x30] sm:$0xff] %v883
          %900 = vst [vmem:[#allocation2 + $0x38] sm:$0xff] %v884
          %901 = vst [vmem:[#allocation2 + $0x40] sm:$0xff] %v885
          %902 = vst [vmem:[#allocation2 + $0x48] sm:$0xff] %v886
          %903 = vst [vmem:[#allocation2 + $0x50] sm:$0xff] %v887
          %904 = vst [vmem:[#allocation2 + $0x58] sm:$0xff] %v888
          %905 = vst [vmem:[#allocation2 + $0x60] sm:$0xff] %v889
          %906 = vst [vmem:[#allocation2 + $0x68] sm:$0xff] %v890
          %907 = vst [vmem:[#allocation2 + $0x70] sm:$0xff] %v891
          %908 = vst [vmem:[#allocation2 + $0x78] sm:$0xff] %v892
          %v909 = vld [vmem:[#allocation3] sm:$0xff]
          %v910 = vld [vmem:[#allocation3 + $0x8] sm:$0xff]
          %v911 = vld [vmem:[#allocation3 + $0x10] sm:$0xff]
          %v912 = vld [vmem:[#allocation3 + $0x18] sm:$0xff]
          %v913 = vld [vmem:[#allocation3 + $0x20] sm:$0xff]
          %v914 = vld [vmem:[#allocation3 + $0x28] sm:$0xff]
          %v915 = vld [vmem:[#allocation3 + $0x30] sm:$0xff]
          %v916 = vld [vmem:[#allocation3 + $0x38] sm:$0xff]
          %v917 = vld [vmem:[#allocation3 + $0x40] sm:$0xff]
          %v918 = vld [vmem:[#allocation3 + $0x48] sm:$0xff]
          %v919 = vld [vmem:[#allocation3 + $0x50] sm:$0xff]
          %v920 = vld [vmem:[#allocation3 + $0x58] sm:$0xff]
          %v921 = vld [vmem:[#allocation3 + $0x60] sm:$0xff]
          %v922 = vld [vmem:[#allocation3 + $0x68] sm:$0xff]
          %v923 = vld [vmem:[#allocation3 + $0x70] sm:$0xff]
          %v924 = vld [vmem:[#allocation3 + $0x78] sm:$0xff]
          %v925 = vadd.f32 %v909, %v845
          %v926 = vadd.f32 %v910, %v846
          %v927 = vadd.f32 %v911, %v847
          %v928 = vadd.f32 %v912, %v848
          %v929 = vadd.f32 %v913, %v849
          %v930 = vadd.f32 %v914, %v850
          %v931 = vadd.f32 %v915, %v851
          %v932 = vadd.f32 %v916, %v852
          %v933 = vadd.f32 %v917, %v853
          %v934 = vadd.f32 %v918, %v854
          %v935 = vadd.f32 %v919, %v855
          %v936 = vadd.f32 %v920, %v856
          %v937 = vadd.f32 %v921, %v857
          %v938 = vadd.f32 %v922, %v858
          %v939 = vadd.f32 %v923, %v859
          %v940 = vadd.f32 %v924, %v860
          %941 = vst [vmem:[#allocation3] sm:$0xff] %v925
          %942 = vst [vmem:[#allocation3 + $0x8] sm:$0xff] %v926
          %943 = vst [vmem:[#allocation3 + $0x10] sm:$0xff] %v927
          %944 = vst [vmem:[#allocation3 + $0x18] sm:$0xff] %v928
          %945 = vst [vmem:[#allocation3 + $0x20] sm:$0xff] %v929
          %946 = vst [vmem:[#allocation3 + $0x28] sm:$0xff] %v930
          %947 = vst [vmem:[#allocation3 + $0x30] sm:$0xff] %v931
          %948 = vst [vmem:[#allocation3 + $0x38] sm:$0xff] %v932
          %949 = vst [vmem:[#allocation3 + $0x40] sm:$0xff] %v933
          %950 = vst [vmem:[#allocation3 + $0x48] sm:$0xff] %v934
          %951 = vst [vmem:[#allocation3 + $0x50] sm:$0xff] %v935
          %952 = vst [vmem:[#allocation3 + $0x58] sm:$0xff] %v936
          %953 = vst [vmem:[#allocation3 + $0x60] sm:$0xff] %v937
          %954 = vst [vmem:[#allocation3 + $0x68] sm:$0xff] %v938
          %955 = vst [vmem:[#allocation3 + $0x70] sm:$0xff] %v939
          %956 = vst [vmem:[#allocation3 + $0x78] sm:$0xff] %v940
        $region48: #{tpu_custom_call.1} parent=35 // pred_fallthru
          _
        // Predicated region
        $region49: #{tpu_custom_call.1} parent=35 // pred_check
          %p957 = pneg %p221
        $region50: #{tpu_custom_call.1} parent=35 // pred_check_branch
          %959 = sbr.rel (%p957) target = $region52
        $region51: #{tpu_custom_call.1} parent=35 // pred_region
          %v960 = vld [vmem:[%s199] sm:$0xff]
          %v961 = vld [vmem:[%s199 + $0x8] sm:$0xff]
          %v962 = vld [vmem:[%s199 + $0x10] sm:$0xff]
          %v963 = vld [vmem:[%s199 + $0x18] sm:$0xff]
          %v964 = vld [vmem:[%s199 + $0x20] sm:$0xff]
          %v965 = vld [vmem:[%s199 + $0x28] sm:$0xff]
          %v966 = vld [vmem:[%s199 + $0x30] sm:$0xff]
          %v967 = vld [vmem:[%s199 + $0x38] sm:$0xff]
          %v968 = vld [vmem:[%s199 + $0x40] sm:$0xff]
          %v969 = vld [vmem:[%s199 + $0x48] sm:$0xff]
          %v970 = vld [vmem:[%s199 + $0x50] sm:$0xff]
          %v971 = vld [vmem:[%s199 + $0x58] sm:$0xff]
          %v972 = vld [vmem:[%s199 + $0x60] sm:$0xff]
          %v973 = vld [vmem:[%s199 + $0x68] sm:$0xff]
          %v974 = vld [vmem:[%s199 + $0x70] sm:$0xff]
          %v975 = vld [vmem:[%s199 + $0x78] sm:$0xff]
          %v976 = vld [vmem:[%s199 + $0x80] sm:$0xff]
          %v977 = vld [vmem:[%s199 + $0x88] sm:$0xff]
          %v978 = vld [vmem:[%s199 + $0x90] sm:$0xff]
          %v979 = vld [vmem:[%s199 + $0x98] sm:$0xff]
          %v980 = vld [vmem:[%s199 + $0xa0] sm:$0xff]
          %v981 = vld [vmem:[%s199 + $0xa8] sm:$0xff]
          %v982 = vld [vmem:[%s199 + $0xb0] sm:$0xff]
          %v983 = vld [vmem:[%s199 + $0xb8] sm:$0xff]
          %v984 = vld [vmem:[%s199 + $0xc0] sm:$0xff]
          %v985 = vld [vmem:[%s199 + $0xc8] sm:$0xff]
          %v986 = vld [vmem:[%s199 + $0xd0] sm:$0xff]
          %v987 = vld [vmem:[%s199 + $0xd8] sm:$0xff]
          %v988 = vld [vmem:[%s199 + $0xe0] sm:$0xff]
          %v989 = vld [vmem:[%s199 + $0xe8] sm:$0xff]
          %v990 = vld [vmem:[%s199 + $0xf0] sm:$0xff]
          %v991 = vld [vmem:[%s199 + $0xf8] sm:$0xff]
          %992 = vmatprep.subr.mxu0 %v961
          %993 = vmatpush1.msra.mxu0 %v960
          %994 = vmatprep.subr.mxu0 %v963
          %995 = vmatpush1.msra.mxu0 %v962
          %996 = vmatprep.subr.mxu0 %v965
          %997 = vmatpush1.msra.mxu0 %v964
          %998 = vmatprep.subr.mxu0 %v967
          %999 = vmatpush1.msra.mxu0 %v966
          %1000 = vmatprep.subr.mxu0 %v969
          %1001 = vmatpush1.msra.mxu0 %v968
          %1002 = vmatprep.subr.mxu0 %v971
          %1003 = vmatpush1.msra.mxu0 %v970
          %1004 = vmatprep.subr.mxu0 %v973
          %1005 = vmatpush1.msra.mxu0 %v972
          %1006 = vmatprep.subr.mxu0 %v975
          %1007 = vmatpush1.msra.mxu0 %v974
          %1008 = vmatprep.subr.mxu0 %v977
          %1009 = vmatpush1.msra.mxu0 %v976
          %1010 = vmatprep.subr.mxu0 %v979
          %1011 = vmatpush1.msra.mxu0 %v978
          %1012 = vmatprep.subr.mxu0 %v981
          %1013 = vmatpush1.msra.mxu0 %v980
          %1014 = vmatprep.subr.mxu0 %v983
          %1015 = vmatpush1.msra.mxu0 %v982
          %1016 = vmatprep.subr.mxu0 %v985
          %1017 = vmatpush1.msra.mxu0 %v984
          %1018 = vmatprep.subr.mxu0 %v987
          %1019 = vmatpush1.msra.mxu0 %v986
          %1020 = vmatprep.subr.mxu0 %v989
          %1021 = vmatpush1.msra.mxu0 %v988
          %1022 = vmatprep.subr.mxu0 %v991
          %1023 = vmatpush1.msra.mxu0 %v990
          %1024 = vmatprep.subr.mxu0 0.0
          %1025 = vmatpush1.msra.mxu0 0.0
          %1026 = vmatprep.subr.mxu0 0.0
          %1027 = vmatpush1.msra.mxu0 0.0
          %1028 = vmatprep.subr.mxu0 0.0
          %1029 = vmatpush1.msra.mxu0 0.0
          %1030 = vmatprep.subr.mxu0 0.0
          %1031 = vmatpush1.msra.mxu0 0.0
          %1032 = vmatprep.subr.mxu0 0.0
          %1033 = vmatpush1.msra.mxu0 0.0
          %1034 = vmatprep.subr.mxu0 0.0
          %1035 = vmatpush1.msra.mxu0 0.0
          %1036 = vmatprep.subr.mxu0 0.0
          %1037 = vmatpush1.msra.mxu0 0.0
          %1038 = vmatprep.subr.mxu0 0.0
          %1039 = vmatpush1.msra.mxu0 0.0
          %1040 = vmatprep.subr.mxu0 0.0
          %1041 = vmatpush1.msra.mxu0 0.0
          %1042 = vmatprep.subr.mxu0 0.0
          %1043 = vmatpush1.msra.mxu0 0.0
          %1044 = vmatprep.subr.mxu0 0.0
          %1045 = vmatpush1.msra.mxu0 0.0
          %1046 = vmatprep.subr.mxu0 0.0
          %1047 = vmatpush1.msra.mxu0 0.0
          %1048 = vmatprep.subr.mxu0 0.0
          %1049 = vmatpush1.msra.mxu0 0.0
          %1050 = vmatprep.subr.mxu0 0.0
          %1051 = vmatpush1.msra.mxu0 0.0
          %1052 = vmatprep.subr.mxu0 0.0
          %1053 = vmatpush1.msra.mxu0 0.0
          %1054 = vmatprep.subr.mxu0 0.0
          %1055 = vmatpush1.msra.mxu0 0.0
          %1056 = vmatprep.mubr.f32.mxu0 0.0
          %1057 = vmatmul.mubr.f32.gmra.mrb[0].mxu0 %v227
          %v1058 = vpop.f32.mrb[0].mxu0
          %v1059 = vadd.f32 0.0, %v1058
          %v1060 = vpop.f32.mrb[0].mxu0
          %v1061 = vadd.f32 0.0, %v1060
          %1062 = vmatprep.mubr.f32.mxu0 0.0
          %1063 = vmatmul.mubr.f32.gmra.mrb[0].mxu0 %v228
          %v1064 = vpop.f32.mrb[0].mxu0
          %v1065 = vadd.f32 0.0, %v1064
          %v1066 = vpop.f32.mrb[0].mxu0
          %v1067 = vadd.f32 0.0, %v1066
          %1068 = vmatprep.mubr.f32.mxu0 0.0
          %1069 = vmatmul.mubr.f32.gmra.mrb[0].mxu0 %v229
          %v1070 = vpop.f32.mrb[0].mxu0
          %v1071 = vadd.f32 0.0, %v1070
          %v1072 = vpop.f32.mrb[0].mxu0
          %v1073 = vadd.f32 0.0, %v1072
          %1074 = vmatprep.mubr.f32.mxu0 0.0
          %1075 = vmatmul.mubr.f32.gmra.mrb[0].mxu0 %v230
          %v1076 = vpop.f32.mrb[0].mxu0
          %v1077 = vadd.f32 0.0, %v1076
          %v1078 = vpop.f32.mrb[0].mxu0
          %v1079 = vadd.f32 0.0, %v1078
          %1080 = vmatprep.mubr.f32.mxu0 0.0
          %1081 = vmatmul.mubr.f32.gmra.mrb[0].mxu0 %v231
          %v1082 = vpop.f32.mrb[0].mxu0
          %v1083 = vadd.f32 0.0, %v1082
          %v1084 = vpop.f32.mrb[0].mxu0
          %v1085 = vadd.f32 0.0, %v1084
          %1086 = vmatprep.mubr.f32.mxu0 0.0
          %1087 = vmatmul.mubr.f32.gmra.mrb[0].mxu0 %v232
          %v1088 = vpop.f32.mrb[0].mxu0
          %v1089 = vadd.f32 0.0, %v1088
          %v1090 = vpop.f32.mrb[0].mxu0
          %v1091 = vadd.f32 0.0, %v1090
          %1092 = vmatprep.mubr.f32.mxu0 0.0
          %1093 = vmatmul.mubr.f32.gmra.mrb[0].mxu0 %v233
          %v1094 = vpop.f32.mrb[0].mxu0
          %v1095 = vadd.f32 0.0, %v1094
          %v1096 = vpop.f32.mrb[0].mxu0
          %v1097 = vadd.f32 0.0, %v1096
          %1098 = vmatprep.mubr.f32.mxu0 0.0
          %1099 = vmatmul.mubr.f32.gmra.mrb[0].mxu0 %v234
          %v1100 = vpop.f32.mrb[0].mxu0
          %v1101 = vadd.f32 0.0, %v1100
          %v1102 = vpop.f32.mrb[0].mxu0
          %v1103 = vadd.f32 0.0, %v1102
          %1104 = vmatprep.mubr.f32.mxu0 0.0
          %1105 = vmatmul.mubr.f32.gmra.mrb[0].mxu0 %v235
          %v1106 = vpop.f32.mrb[0].mxu0
          %v1107 = vadd.f32 0.0, %v1106
          %v1108 = vpop.f32.mrb[0].mxu0
          %v1109 = vadd.f32 0.0, %v1108
          %1110 = vmatprep.mubr.f32.mxu0 0.0
          %1111 = vmatmul.mubr.f32.gmra.mrb[0].mxu0 %v236
          %v1112 = vpop.f32.mrb[0].mxu0
          %v1113 = vadd.f32 0.0, %v1112
          %v1114 = vpop.f32.mrb[0].mxu0
          %v1115 = vadd.f32 0.0, %v1114
          %1116 = vmatprep.mubr.f32.mxu0 0.0
          %1117 = vmatmul.mubr.f32.gmra.mrb[0].mxu0 %v237
          %v1118 = vpop.f32.mrb[0].mxu0
          %v1119 = vadd.f32 0.0, %v1118
          %v1120 = vpop.f32.mrb[0].mxu0
          %v1121 = vadd.f32 0.0, %v1120
          %1122 = vmatprep.mubr.f32.mxu0 0.0
          %1123 = vmatmul.mubr.f32.gmra.mrb[0].mxu0 %v238
          %v1124 = vpop.f32.mrb[0].mxu0
          %v1125 = vadd.f32 0.0, %v1124
          %v1126 = vpop.f32.mrb[0].mxu0
          %v1127 = vadd.f32 0.0, %v1126
          %1128 = vmatprep.mubr.f32.mxu0 0.0
          %1129 = vmatmul.mubr.f32.gmra.mrb[0].mxu0 %v239
          %v1130 = vpop.f32.mrb[0].mxu0
          %v1131 = vadd.f32 0.0, %v1130
          %v1132 = vpop.f32.mrb[0].mxu0
          %v1133 = vadd.f32 0.0, %v1132
          %1134 = vmatprep.mubr.f32.mxu0 0.0
          %1135 = vmatmul.mubr.f32.gmra.mrb[0].mxu0 %v240
          %v1136 = vpop.f32.mrb[0].mxu0
          %v1137 = vadd.f32 0.0, %v1136
          %v1138 = vpop.f32.mrb[0].mxu0
          %v1139 = vadd.f32 0.0, %v1138
          %1140 = vmatprep.mubr.f32.mxu0 0.0
          %1141 = vmatmul.mubr.f32.gmra.mrb[0].mxu0 %v241
          %v1142 = vpop.f32.mrb[0].mxu0
          %v1143 = vadd.f32 0.0, %v1142
          %v1144 = vpop.f32.mrb[0].mxu0
          %v1145 = vadd.f32 0.0, %v1144
          %1146 = vmatprep.mubr.f32.mxu0 0.0
          %1147 = vmatmul.mubr.f32.gmra.mrb[0].mxu0 %v242
          %v1148 = vpop.f32.mrb[0].mxu0
          %v1149 = vadd.f32 0.0, %v1148
          %v1150 = vpop.f32.mrb[0].mxu0
          %v1151 = vadd.f32 0.0, %v1150
          %1152 = vdwg.mxu0
          %v1153 = vlaneseq
          %v1154 = vand.u32 %v1153, 127
          %v1155 = vadd.s32 %v1154, 128
          %s1156 = smul.u32 %s23, 256
          %v1157 = vstv %s1156
          %v1158 = vadd.s32 %v1154, %v1157
          %v1159 = vadd.s32 %v1155, %v1157
          %vm1160 = vcmp.lt.s32.totalorder %v1158, 256
          %vm1161 = vcmp.lt.s32.totalorder %v1159, 256
          %v1162 = vsel %vm1160, 1, 0
          %v1163 = vsel %vm1161, 1, 0
          %vm1164 = vcmp.eq.s32.totalorder %v1162, 1
          %vm1165 = vcmp.eq.s32.totalorder %v1163, 1
          %v1166 = vsel %vm1164, %v1059, 0.0
          %v1167 = vsel %vm1165, %v1061, 0.0
          %v1168 = vsel %vm1164, %v1065, 0.0
          %v1169 = vsel %vm1165, %v1067, 0.0
          %v1170 = vsel %vm1164, %v1071, 0.0
          %v1171 = vsel %vm1165, %v1073, 0.0
          %v1172 = vsel %vm1164, %v1077, 0.0
          %v1173 = vsel %vm1165, %v1079, 0.0
          %v1174 = vsel %vm1164, %v1083, 0.0
          %v1175 = vsel %vm1165, %v1085, 0.0
          %v1176 = vsel %vm1164, %v1089, 0.0
          %v1177 = vsel %vm1165, %v1091, 0.0
          %v1178 = vsel %vm1164, %v1095, 0.0
          %v1179 = vsel %vm1165, %v1097, 0.0
          %v1180 = vsel %vm1164, %v1101, 0.0
          %v1181 = vsel %vm1165, %v1103, 0.0
          %v1182 = vsel %vm1164, %v1107, 0.0
          %v1183 = vsel %vm1165, %v1109, 0.0
          %v1184 = vsel %vm1164, %v1113, 0.0
          %v1185 = vsel %vm1165, %v1115, 0.0
          %v1186 = vsel %vm1164, %v1119, 0.0
          %v1187 = vsel %vm1165, %v1121, 0.0
          %v1188 = vsel %vm1164, %v1125, 0.0
          %v1189 = vsel %vm1165, %v1127, 0.0
          %v1190 = vsel %vm1164, %v1131, 0.0
          %v1191 = vsel %vm1165, %v1133, 0.0
          %v1192 = vsel %vm1164, %v1137, 0.0
          %v1193 = vsel %vm1165, %v1139, 0.0
          %v1194 = vsel %vm1164, %v1143, 0.0
          %v1195 = vsel %vm1165, %v1145, 0.0
          %v1196 = vsel %vm1164, %v1149, 0.0
          %v1197 = vsel %vm1165, %v1151, 0.0
          %1199 = vset.pattern.permute.xlu0 0
          %1200 = vperm.xlu0 %1199, %v472
          %v1201 = vpop.permute.xlu0 %1200
          %1204 = vset.pattern.permute.xlu0 0
          %1205 = vperm.xlu0 %1204, %v473
          %v1206 = vpop.permute.xlu0 %1205
          %1209 = vset.pattern.permute.xlu0 0
          %1210 = vperm.xlu0 %1209, %v474
          %v1211 = vpop.permute.xlu0 %1210
          %1214 = vset.pattern.permute.xlu0 0
          %1215 = vperm.xlu0 %1214, %v475
          %v1216 = vpop.permute.xlu0 %1215
          %1219 = vset.pattern.permute.xlu0 0
          %1220 = vperm.xlu0 %1219, %v476
          %v1221 = vpop.permute.xlu0 %1220
          %1224 = vset.pattern.permute.xlu0 0
          %1225 = vperm.xlu0 %1224, %v477
          %v1226 = vpop.permute.xlu0 %1225
          %1229 = vset.pattern.permute.xlu0 0
          %1230 = vperm.xlu0 %1229, %v478
          %v1231 = vpop.permute.xlu0 %1230
          %1234 = vset.pattern.permute.xlu0 0
          %1235 = vperm.xlu0 %1234, %v479
          %v1236 = vpop.permute.xlu0 %1235
          %1239 = vset.pattern.permute.xlu0 0
          %1240 = vperm.xlu0 %1239, %v480
          %v1241 = vpop.permute.xlu0 %1240
          %1244 = vset.pattern.permute.xlu0 0
          %1245 = vperm.xlu0 %1244, %v481
          %v1246 = vpop.permute.xlu0 %1245
          %1249 = vset.pattern.permute.xlu0 0
          %1250 = vperm.xlu0 %1249, %v482
          %v1251 = vpop.permute.xlu0 %1250
          %1254 = vset.pattern.permute.xlu0 0
          %1255 = vperm.xlu0 %1254, %v483
          %v1256 = vpop.permute.xlu0 %1255
          %1259 = vset.pattern.permute.xlu0 0
          %1260 = vperm.xlu0 %1259, %v484
          %v1261 = vpop.permute.xlu0 %1260
          %1264 = vset.pattern.permute.xlu0 0
          %1265 = vperm.xlu0 %1264, %v485
          %v1266 = vpop.permute.xlu0 %1265
          %1269 = vset.pattern.permute.xlu0 0
          %1270 = vperm.xlu0 %1269, %v486
          %v1271 = vpop.permute.xlu0 %1270
          %1274 = vset.pattern.permute.xlu0 0
          %1275 = vperm.xlu0 %1274, %v487
          %v1276 = vpop.permute.xlu0 %1275
          %v1278 = vsub.f32 %v1059, %v1201
          %v1279 = vsub.f32 %v1061, %v1201
          %v1280 = vsub.f32 %v1065, %v1206
          %v1281 = vsub.f32 %v1067, %v1206
          %v1282 = vsub.f32 %v1071, %v1211
          %v1283 = vsub.f32 %v1073, %v1211
          %v1284 = vsub.f32 %v1077, %v1216
          %v1285 = vsub.f32 %v1079, %v1216
          %v1286 = vsub.f32 %v1083, %v1221
          %v1287 = vsub.f32 %v1085, %v1221
          %v1288 = vsub.f32 %v1089, %v1226
          %v1289 = vsub.f32 %v1091, %v1226
          %v1290 = vsub.f32 %v1095, %v1231
          %v1291 = vsub.f32 %v1097, %v1231
          %v1292 = vsub.f32 %v1101, %v1236
          %v1293 = vsub.f32 %v1103, %v1236
          %v1294 = vsub.f32 %v1107, %v1241
          %v1295 = vsub.f32 %v1109, %v1241
          %v1296 = vsub.f32 %v1113, %v1246
          %v1297 = vsub.f32 %v1115, %v1246
          %v1298 = vsub.f32 %v1119, %v1251
          %v1299 = vsub.f32 %v1121, %v1251
          %v1300 = vsub.f32 %v1125, %v1256
          %v1301 = vsub.f32 %v1127, %v1256
          %v1302 = vsub.f32 %v1131, %v1261
          %v1303 = vsub.f32 %v1133, %v1261
          %v1304 = vsub.f32 %v1137, %v1266
          %v1305 = vsub.f32 %v1139, %v1266
          %v1306 = vsub.f32 %v1143, %v1271
          %v1307 = vsub.f32 %v1145, %v1271
          %v1308 = vsub.f32 %v1149, %v1276
          %v1309 = vsub.f32 %v1151, %v1276
          %v1310 = vsel %vm1164, %v1278, 0.0
          %v1311 = vsel %vm1165, %v1279, 0.0
          %v1312 = vsel %vm1164, %v1280, 0.0
          %v1313 = vsel %vm1165, %v1281, 0.0
          %v1314 = vsel %vm1164, %v1282, 0.0
          %v1315 = vsel %vm1165, %v1283, 0.0
          %v1316 = vsel %vm1164, %v1284, 0.0
          %v1317 = vsel %vm1165, %v1285, 0.0
          %v1318 = vsel %vm1164, %v1286, 0.0
          %v1319 = vsel %vm1165, %v1287, 0.0
          %v1320 = vsel %vm1164, %v1288, 0.0
          %v1321 = vsel %vm1165, %v1289, 0.0
          %v1322 = vsel %vm1164, %v1290, 0.0
          %v1323 = vsel %vm1165, %v1291, 0.0
          %v1324 = vsel %vm1164, %v1292, 0.0
          %v1325 = vsel %vm1165, %v1293, 0.0
          %v1326 = vsel %vm1164, %v1294, 0.0
          %v1327 = vsel %vm1165, %v1295, 0.0
          %v1328 = vsel %vm1164, %v1296, 0.0
          %v1329 = vsel %vm1165, %v1297, 0.0
          %v1330 = vsel %vm1164, %v1298, 0.0
          %v1331 = vsel %vm1165, %v1299, 0.0
          %v1332 = vsel %vm1164, %v1300, 0.0
          %v1333 = vsel %vm1165, %v1301, 0.0
          %v1334 = vsel %vm1164, %v1302, 0.0
          %v1335 = vsel %vm1165, %v1303, 0.0
          %v1336 = vsel %vm1164, %v1304, 0.0
          %v1337 = vsel %vm1165, %v1305, 0.0
          %v1338 = vsel %vm1164, %v1306, 0.0
          %v1339 = vsel %vm1165, %v1307, 0.0
          %v1340 = vsel %vm1164, %v1308, 0.0
          %v1341 = vsel %vm1165, %v1309, 0.0
          %v1342 = vmul.f32 %v1310, %v1310
          %v1343 = vmul.f32 %v1311, %v1311
          %v1344 = vmul.f32 %v1312, %v1312
          %v1345 = vmul.f32 %v1313, %v1313
          %v1346 = vmul.f32 %v1314, %v1314
          %v1347 = vmul.f32 %v1315, %v1315
          %v1348 = vmul.f32 %v1316, %v1316
          %v1349 = vmul.f32 %v1317, %v1317
          %v1350 = vmul.f32 %v1318, %v1318
          %v1351 = vmul.f32 %v1319, %v1319
          %v1352 = vmul.f32 %v1320, %v1320
          %v1353 = vmul.f32 %v1321, %v1321
          %v1354 = vmul.f32 %v1322, %v1322
          %v1355 = vmul.f32 %v1323, %v1323
          %v1356 = vmul.f32 %v1324, %v1324
          %v1357 = vmul.f32 %v1325, %v1325
          %v1358 = vmul.f32 %v1326, %v1326
          %v1359 = vmul.f32 %v1327, %v1327
          %v1360 = vmul.f32 %v1328, %v1328
          %v1361 = vmul.f32 %v1329, %v1329
          %v1362 = vmul.f32 %v1330, %v1330
          %v1363 = vmul.f32 %v1331, %v1331
          %v1364 = vmul.f32 %v1332, %v1332
          %v1365 = vmul.f32 %v1333, %v1333
          %v1366 = vmul.f32 %v1334, %v1334
          %v1367 = vmul.f32 %v1335, %v1335
          %v1368 = vmul.f32 %v1336, %v1336
          %v1369 = vmul.f32 %v1337, %v1337
          %v1370 = vmul.f32 %v1338, %v1338
          %v1371 = vmul.f32 %v1339, %v1339
          %v1372 = vmul.f32 %v1340, %v1340
          %v1373 = vmul.f32 %v1341, %v1341
          %v1374 = vadd.f32 %v1166, %v1167
          %v1375 = vadd.f32 %v1168, %v1169
          %v1376 = vadd.f32 %v1170, %v1171
          %v1377 = vadd.f32 %v1172, %v1173
          %v1378 = vadd.f32 %v1174, %v1175
          %v1379 = vadd.f32 %v1176, %v1177
          %v1380 = vadd.f32 %v1178, %v1179
          %v1381 = vadd.f32 %v1180, %v1181
          %v1382 = vadd.f32 %v1182, %v1183
          %v1383 = vadd.f32 %v1184, %v1185
          %v1384 = vadd.f32 %v1186, %v1187
          %v1385 = vadd.f32 %v1188, %v1189
          %v1386 = vadd.f32 %v1190, %v1191
          %v1387 = vadd.f32 %v1192, %v1193
          %v1388 = vadd.f32 %v1194, %v1195
          %v1389 = vadd.f32 %v1196, %v1197
          %v1390 = vadd.f32 %v1342, %v1343
          %v1391 = vadd.f32 %v1344, %v1345
          %v1392 = vadd.f32 %v1346, %v1347
          %v1393 = vadd.f32 %v1348, %v1349
          %v1394 = vadd.f32 %v1350, %v1351
          %v1395 = vadd.f32 %v1352, %v1353
          %v1396 = vadd.f32 %v1354, %v1355
          %v1397 = vadd.f32 %v1356, %v1357
          %v1398 = vadd.f32 %v1358, %v1359
          %v1399 = vadd.f32 %v1360, %v1361
          %v1400 = vadd.f32 %v1362, %v1363
          %v1401 = vadd.f32 %v1364, %v1365
          %v1402 = vadd.f32 %v1366, %v1367
          %v1403 = vadd.f32 %v1368, %v1369
          %v1404 = vadd.f32 %v1370, %v1371
          %v1405 = vadd.f32 %v1372, %v1373
          %v1406 = vld [vmem:[#allocation2] sm:$0xff]
          %v1407 = vld [vmem:[#allocation2 + $0x8] sm:$0xff]
          %v1408 = vld [vmem:[#allocation2 + $0x10] sm:$0xff]
          %v1409 = vld [vmem:[#allocation2 + $0x18] sm:$0xff]
          %v1410 = vld [vmem:[#allocation2 + $0x20] sm:$0xff]
          %v1411 = vld [vmem:[#allocation2 + $0x28] sm:$0xff]
          %v1412 = vld [vmem:[#allocation2 + $0x30] sm:$0xff]
          %v1413 = vld [vmem:[#allocation2 + $0x38] sm:$0xff]
          %v1414 = vld [vmem:[#allocation2 + $0x40] sm:$0xff]
          %v1415 = vld [vmem:[#allocation2 + $0x48] sm:$0xff]
          %v1416 = vld [vmem:[#allocation2 + $0x50] sm:$0xff]
          %v1417 = vld [vmem:[#allocation2 + $0x58] sm:$0xff]
          %v1418 = vld [vmem:[#allocation2 + $0x60] sm:$0xff]
          %v1419 = vld [vmem:[#allocation2 + $0x68] sm:$0xff]
          %v1420 = vld [vmem:[#allocation2 + $0x70] sm:$0xff]
          %v1421 = vld [vmem:[#allocation2 + $0x78] sm:$0xff]
          %v1422 = vadd.f32 %v1406, %v1374
          %v1423 = vadd.f32 %v1407, %v1375
          %v1424 = vadd.f32 %v1408, %v1376
          %v1425 = vadd.f32 %v1409, %v1377
          %v1426 = vadd.f32 %v1410, %v1378
          %v1427 = vadd.f32 %v1411, %v1379
          %v1428 = vadd.f32 %v1412, %v1380
          %v1429 = vadd.f32 %v1413, %v1381
          %v1430 = vadd.f32 %v1414, %v1382
          %v1431 = vadd.f32 %v1415, %v1383
          %v1432 = vadd.f32 %v1416, %v1384
          %v1433 = vadd.f32 %v1417, %v1385
          %v1434 = vadd.f32 %v1418, %v1386
          %v1435 = vadd.f32 %v1419, %v1387
          %v1436 = vadd.f32 %v1420, %v1388
          %v1437 = vadd.f32 %v1421, %v1389
          %1438 = vst [vmem:[#allocation2] sm:$0xff] %v1422
          %1439 = vst [vmem:[#allocation2 + $0x8] sm:$0xff] %v1423
          %1440 = vst [vmem:[#allocation2 + $0x10] sm:$0xff] %v1424
          %1441 = vst [vmem:[#allocation2 + $0x18] sm:$0xff] %v1425
          %1442 = vst [vmem:[#allocation2 + $0x20] sm:$0xff] %v1426
          %1443 = vst [vmem:[#allocation2 + $0x28] sm:$0xff] %v1427
          %1444 = vst [vmem:[#allocation2 + $0x30] sm:$0xff] %v1428
          %1445 = vst [vmem:[#allocation2 + $0x38] sm:$0xff] %v1429
          %1446 = vst [vmem:[#allocation2 + $0x40] sm:$0xff] %v1430
          %1447 = vst [vmem:[#allocation2 + $0x48] sm:$0xff] %v1431
          %1448 = vst [vmem:[#allocation2 + $0x50] sm:$0xff] %v1432
          %1449 = vst [vmem:[#allocation2 + $0x58] sm:$0xff] %v1433
          %1450 = vst [vmem:[#allocation2 + $0x60] sm:$0xff] %v1434
          %1451 = vst [vmem:[#allocation2 + $0x68] sm:$0xff] %v1435
          %1452 = vst [vmem:[#allocation2 + $0x70] sm:$0xff] %v1436
          %1453 = vst [vmem:[#allocation2 + $0x78] sm:$0xff] %v1437
          %v1454 = vld [vmem:[#allocation3] sm:$0xff]
          %v1455 = vld [vmem:[#allocation3 + $0x8] sm:$0xff]
          %v1456 = vld [vmem:[#allocation3 + $0x10] sm:$0xff]
          %v1457 = vld [vmem:[#allocation3 + $0x18] sm:$0xff]
          %v1458 = vld [vmem:[#allocation3 + $0x20] sm:$0xff]
          %v1459 = vld [vmem:[#allocation3 + $0x28] sm:$0xff]
          %v1460 = vld [vmem:[#allocation3 + $0x30] sm:$0xff]
          %v1461 = vld [vmem:[#allocation3 + $0x38] sm:$0xff]
          %v1462 = vld [vmem:[#allocation3 + $0x40] sm:$0xff]
          %v1463 = vld [vmem:[#allocation3 + $0x48] sm:$0xff]
          %v1464 = vld [vmem:[#allocation3 + $0x50] sm:$0xff]
          %v1465 = vld [vmem:[#allocation3 + $0x58] sm:$0xff]
          %v1466 = vld [vmem:[#allocation3 + $0x60] sm:$0xff]
          %v1467 = vld [vmem:[#allocation3 + $0x68] sm:$0xff]
          %v1468 = vld [vmem:[#allocation3 + $0x70] sm:$0xff]
          %v1469 = vld [vmem:[#allocation3 + $0x78] sm:$0xff]
          %v1470 = vadd.f32 %v1454, %v1390
          %v1471 = vadd.f32 %v1455, %v1391
          %v1472 = vadd.f32 %v1456, %v1392
          %v1473 = vadd.f32 %v1457, %v1393
          %v1474 = vadd.f32 %v1458, %v1394
          %v1475 = vadd.f32 %v1459, %v1395
          %v1476 = vadd.f32 %v1460, %v1396
          %v1477 = vadd.f32 %v1461, %v1397
          %v1478 = vadd.f32 %v1462, %v1398
          %v1479 = vadd.f32 %v1463, %v1399
          %v1480 = vadd.f32 %v1464, %v1400
          %v1481 = vadd.f32 %v1465, %v1401
          %v1482 = vadd.f32 %v1466, %v1402
          %v1483 = vadd.f32 %v1467, %v1403
          %v1484 = vadd.f32 %v1468, %v1404
          %v1485 = vadd.f32 %v1469, %v1405
          %1486 = vst [vmem:[#allocation3] sm:$0xff] %v1470
          %1487 = vst [vmem:[#allocation3 + $0x8] sm:$0xff] %v1471
          %1488 = vst [vmem:[#allocation3 + $0x10] sm:$0xff] %v1472
          %1489 = vst [vmem:[#allocation3 + $0x18] sm:$0xff] %v1473
          %1490 = vst [vmem:[#allocation3 + $0x20] sm:$0xff] %v1474
          %1491 = vst [vmem:[#allocation3 + $0x28] sm:$0xff] %v1475
          %1492 = vst [vmem:[#allocation3 + $0x30] sm:$0xff] %v1476
          %1493 = vst [vmem:[#allocation3 + $0x38] sm:$0xff] %v1477
          %1494 = vst [vmem:[#allocation3 + $0x40] sm:$0xff] %v1478
          %1495 = vst [vmem:[#allocation3 + $0x48] sm:$0xff] %v1479
          %1496 = vst [vmem:[#allocation3 + $0x50] sm:$0xff] %v1480
          %1497 = vst [vmem:[#allocation3 + $0x58] sm:$0xff] %v1481
          %1498 = vst [vmem:[#allocation3 + $0x60] sm:$0xff] %v1482
          %1499 = vst [vmem:[#allocation3 + $0x68] sm:$0xff] %v1483
          %1500 = vst [vmem:[#allocation3 + $0x70] sm:$0xff] %v1484
          %1501 = vst [vmem:[#allocation3 + $0x78] sm:$0xff] %v1485
        $region52: #{tpu_custom_call.1} parent=35 // pred_fallthru
          _
        // Predicated region
        $region53: #{tpu_custom_call.1} parent=35 // pred_check
          _
        $region54: #{tpu_custom_call.1} parent=35 // pred_check_branch
          %1503 = sbr.rel (%p225) target = $region56
        $region55: #{tpu_custom_call.1} parent=35 // pred_region
          %v1504 = vld [vmem:[#allocation2] sm:$0xff]
          %v1505 = vld [vmem:[#allocation2 + $0x8] sm:$0xff]
          %v1506 = vld [vmem:[#allocation2 + $0x10] sm:$0xff]
          %v1507 = vld [vmem:[#allocation2 + $0x18] sm:$0xff]
          %v1508 = vld [vmem:[#allocation2 + $0x20] sm:$0xff]
          %v1509 = vld [vmem:[#allocation2 + $0x28] sm:$0xff]
          %v1510 = vld [vmem:[#allocation2 + $0x30] sm:$0xff]
          %v1511 = vld [vmem:[#allocation2 + $0x38] sm:$0xff]
          %v1512 = vld [vmem:[#allocation2 + $0x40] sm:$0xff]
          %v1513 = vld [vmem:[#allocation2 + $0x48] sm:$0xff]
          %v1514 = vld [vmem:[#allocation2 + $0x50] sm:$0xff]
          %v1515 = vld [vmem:[#allocation2 + $0x58] sm:$0xff]
          %v1516 = vld [vmem:[#allocation2 + $0x60] sm:$0xff]
          %v1517 = vld [vmem:[#allocation2 + $0x68] sm:$0xff]
          %v1518 = vld [vmem:[#allocation2 + $0x70] sm:$0xff]
          %v1519 = vld [vmem:[#allocation2 + $0x78] sm:$0xff]
          %1520 = vadd.xlane.f32.xlu0 %v1504
          %v1521 = vpop.xlane.xlu0 %1520
          %1522 = vadd.xlane.f32.xlu0 %v1505
          %v1523 = vpop.xlane.xlu0 %1522
          %1524 = vadd.xlane.f32.xlu0 %v1506
          %v1525 = vpop.xlane.xlu0 %1524
          %1526 = vadd.xlane.f32.xlu0 %v1507
          %v1527 = vpop.xlane.xlu0 %1526
          %1528 = vadd.xlane.f32.xlu0 %v1508
          %v1529 = vpop.xlane.xlu0 %1528
          %1530 = vadd.xlane.f32.xlu0 %v1509
          %v1531 = vpop.xlane.xlu0 %1530
          %1532 = vadd.xlane.f32.xlu0 %v1510
          %v1533 = vpop.xlane.xlu0 %1532
          %1534 = vadd.xlane.f32.xlu0 %v1511
          %v1535 = vpop.xlane.xlu0 %1534
          %1536 = vadd.xlane.f32.xlu0 %v1512
          %v1537 = vpop.xlane.xlu0 %1536
          %1538 = vadd.xlane.f32.xlu0 %v1513
          %v1539 = vpop.xlane.xlu0 %1538
          %1540 = vadd.xlane.f32.xlu0 %v1514
          %v1541 = vpop.xlane.xlu0 %1540
          %1542 = vadd.xlane.f32.xlu0 %v1515
          %v1543 = vpop.xlane.xlu0 %1542
          %1544 = vadd.xlane.f32.xlu0 %v1516
          %v1545 = vpop.xlane.xlu0 %1544
          %1546 = vadd.xlane.f32.xlu0 %v1517
          %v1547 = vpop.xlane.xlu0 %1546
          %1548 = vadd.xlane.f32.xlu0 %v1518
          %v1549 = vpop.xlane.xlu0 %1548
          %1550 = vadd.xlane.f32.xlu0 %v1519
          %v1551 = vpop.xlane.xlu0 %1550
          %v1552 = vmul.f32 %v1521, 0.001953125
          %v1553 = vmul.f32 %v1523, 0.001953125
          %v1554 = vmul.f32 %v1525, 0.001953125
          %v1555 = vmul.f32 %v1527, 0.001953125
          %v1556 = vmul.f32 %v1529, 0.001953125
          %v1557 = vmul.f32 %v1531, 0.001953125
          %v1558 = vmul.f32 %v1533, 0.001953125
          %v1559 = vmul.f32 %v1535, 0.001953125
          %v1560 = vmul.f32 %v1537, 0.001953125
          %v1561 = vmul.f32 %v1539, 0.001953125
          %v1562 = vmul.f32 %v1541, 0.001953125
          %v1563 = vmul.f32 %v1543, 0.001953125
          %v1564 = vmul.f32 %v1545, 0.001953125
          %v1565 = vmul.f32 %v1547, 0.001953125
          %v1566 = vmul.f32 %v1549, 0.001953125
          %v1567 = vmul.f32 %v1551, 0.001953125
          %v1568 = vld [vmem:[#allocation3] sm:$0xff]
          %v1569 = vld [vmem:[#allocation3 + $0x8] sm:$0xff]
          %v1570 = vld [vmem:[#allocation3 + $0x10] sm:$0xff]
          %v1571 = vld [vmem:[#allocation3 + $0x18] sm:$0xff]
          %v1572 = vld [vmem:[#allocation3 + $0x20] sm:$0xff]
          %v1573 = vld [vmem:[#allocation3 + $0x28] sm:$0xff]
          %v1574 = vld [vmem:[#allocation3 + $0x30] sm:$0xff]
          %v1575 = vld [vmem:[#allocation3 + $0x38] sm:$0xff]
          %v1576 = vld [vmem:[#allocation3 + $0x40] sm:$0xff]
          %v1577 = vld [vmem:[#allocation3 + $0x48] sm:$0xff]
          %v1578 = vld [vmem:[#allocation3 + $0x50] sm:$0xff]
          %v1579 = vld [vmem:[#allocation3 + $0x58] sm:$0xff]
          %v1580 = vld [vmem:[#allocation3 + $0x60] sm:$0xff]
          %v1581 = vld [vmem:[#allocation3 + $0x68] sm:$0xff]
          %v1582 = vld [vmem:[#allocation3 + $0x70] sm:$0xff]
          %v1583 = vld [vmem:[#allocation3 + $0x78] sm:$0xff]
          %1584 = vadd.xlane.f32.xlu0 %v1568
          %v1585 = vpop.xlane.xlu0 %1584
          %1586 = vadd.xlane.f32.xlu0 %v1569
          %v1587 = vpop.xlane.xlu0 %1586
          %1588 = vadd.xlane.f32.xlu0 %v1570
          %v1589 = vpop.xlane.xlu0 %1588
          %1590 = vadd.xlane.f32.xlu0 %v1571
          %v1591 = vpop.xlane.xlu0 %1590
          %1592 = vadd.xlane.f32.xlu0 %v1572
          %v1593 = vpop.xlane.xlu0 %1592
          %1594 = vadd.xlane.f32.xlu0 %v1573
          %v1595 = vpop.xlane.xlu0 %1594
          %1596 = vadd.xlane.f32.xlu0 %v1574
          %v1597 = vpop.xlane.xlu0 %1596
          %1598 = vadd.xlane.f32.xlu0 %v1575
          %v1599 = vpop.xlane.xlu0 %1598
          %1600 = vadd.xlane.f32.xlu0 %v1576
          %v1601 = vpop.xlane.xlu0 %1600
          %1602 = vadd.xlane.f32.xlu0 %v1577
          %v1603 = vpop.xlane.xlu0 %1602
          %1604 = vadd.xlane.f32.xlu0 %v1578
          %v1605 = vpop.xlane.xlu0 %1604
          %1606 = vadd.xlane.f32.xlu0 %v1579
          %v1607 = vpop.xlane.xlu0 %1606
          %1608 = vadd.xlane.f32.xlu0 %v1580
          %v1609 = vpop.xlane.xlu0 %1608
          %1610 = vadd.xlane.f32.xlu0 %v1581
          %v1611 = vpop.xlane.xlu0 %1610
          %1612 = vadd.xlane.f32.xlu0 %v1582
          %v1613 = vpop.xlane.xlu0 %1612
          %1614 = vadd.xlane.f32.xlu0 %v1583
          %v1615 = vpop.xlane.xlu0 %1614
          %v1616 = vld [vmem:[#allocation4] sm:$0xff]
          %v1617 = vld [vmem:[#allocation4 + $0x8] sm:$0xff]
          %v1618 = vld [vmem:[#allocation4 + $0x10] sm:$0xff]
          %v1619 = vld [vmem:[#allocation4 + $0x18] sm:$0xff]
          %v1620 = vld [vmem:[#allocation4 + $0x20] sm:$0xff]
          %v1621 = vld [vmem:[#allocation4 + $0x28] sm:$0xff]
          %v1622 = vld [vmem:[#allocation4 + $0x30] sm:$0xff]
          %v1623 = vld [vmem:[#allocation4 + $0x38] sm:$0xff]
          %v1624 = vld [vmem:[#allocation4 + $0x40] sm:$0xff]
          %v1625 = vld [vmem:[#allocation4 + $0x48] sm:$0xff]
          %v1626 = vld [vmem:[#allocation4 + $0x50] sm:$0xff]
          %v1627 = vld [vmem:[#allocation4 + $0x58] sm:$0xff]
          %v1628 = vld [vmem:[#allocation4 + $0x60] sm:$0xff]
          %v1629 = vld [vmem:[#allocation4 + $0x68] sm:$0xff]
          %v1630 = vld [vmem:[#allocation4 + $0x70] sm:$0xff]
          %v1631 = vld [vmem:[#allocation4 + $0x78] sm:$0xff]
          %v1632 = vsub.f32 %v1552, %v1616
          %v1633 = vsub.f32 %v1553, %v1617
          %v1634 = vsub.f32 %v1554, %v1618
          %v1635 = vsub.f32 %v1555, %v1619
          %v1636 = vsub.f32 %v1556, %v1620
          %v1637 = vsub.f32 %v1557, %v1621
          %v1638 = vsub.f32 %v1558, %v1622
          %v1639 = vsub.f32 %v1559, %v1623
          %v1640 = vsub.f32 %v1560, %v1624
          %v1641 = vsub.f32 %v1561, %v1625
          %v1642 = vsub.f32 %v1562, %v1626
          %v1643 = vsub.f32 %v1563, %v1627
          %v1644 = vsub.f32 %v1564, %v1628
          %v1645 = vsub.f32 %v1565, %v1629
          %v1646 = vsub.f32 %v1566, %v1630
          %v1647 = vsub.f32 %v1567, %v1631
          %v1648 = vmul.f32 %v1585, 0.001953125
          %v1649 = vmul.f32 %v1587, 0.001953125
          %v1650 = vmul.f32 %v1589, 0.001953125
          %v1651 = vmul.f32 %v1591, 0.001953125
          %v1652 = vmul.f32 %v1593, 0.001953125
          %v1653 = vmul.f32 %v1595, 0.001953125
          %v1654 = vmul.f32 %v1597, 0.001953125
          %v1655 = vmul.f32 %v1599, 0.001953125
          %v1656 = vmul.f32 %v1601, 0.001953125
          %v1657 = vmul.f32 %v1603, 0.001953125
          %v1658 = vmul.f32 %v1605, 0.001953125
          %v1659 = vmul.f32 %v1607, 0.001953125
          %v1660 = vmul.f32 %v1609, 0.001953125
          %v1661 = vmul.f32 %v1611, 0.001953125
          %v1662 = vmul.f32 %v1613, 0.001953125
          %v1663 = vmul.f32 %v1615, 0.001953125
          %v1664 = vmul.f32 %v1632, %v1632
          %v1665 = vmul.f32 %v1633, %v1633
          %v1666 = vmul.f32 %v1634, %v1634
          %v1667 = vmul.f32 %v1635, %v1635
          %v1668 = vmul.f32 %v1636, %v1636
          %v1669 = vmul.f32 %v1637, %v1637
          %v1670 = vmul.f32 %v1638, %v1638
          %v1671 = vmul.f32 %v1639, %v1639
          %v1672 = vmul.f32 %v1640, %v1640
          %v1673 = vmul.f32 %v1641, %v1641
          %v1674 = vmul.f32 %v1642, %v1642
          %v1675 = vmul.f32 %v1643, %v1643
          %v1676 = vmul.f32 %v1644, %v1644
          %v1677 = vmul.f32 %v1645, %v1645
          %v1678 = vmul.f32 %v1646, %v1646
          %v1679 = vmul.f32 %v1647, %v1647
          %v1680 = vsub.f32 %v1648, %v1664
          %v1681 = vsub.f32 %v1649, %v1665
          %v1682 = vsub.f32 %v1650, %v1666
          %v1683 = vsub.f32 %v1651, %v1667
          %v1684 = vsub.f32 %v1652, %v1668
          %v1685 = vsub.f32 %v1653, %v1669
          %v1686 = vsub.f32 %v1654, %v1670
          %v1687 = vsub.f32 %v1655, %v1671
          %v1688 = vsub.f32 %v1656, %v1672
          %v1689 = vsub.f32 %v1657, %v1673
          %v1690 = vsub.f32 %v1658, %v1674
          %v1691 = vsub.f32 %v1659, %v1675
          %v1692 = vsub.f32 %v1660, %v1676
          %v1693 = vsub.f32 %v1661, %v1677
          %v1694 = vsub.f32 %v1662, %v1678
          %v1695 = vsub.f32 %v1663, %v1679
          %v1696 = vmax.f32 %v1680, 0.0
          %v1697 = vmax.f32 %v1681, 0.0
          %v1698 = vmax.f32 %v1682, 0.0
          %v1699 = vmax.f32 %v1683, 0.0
          %v1700 = vmax.f32 %v1684, 0.0
          %v1701 = vmax.f32 %v1685, 0.0
          %v1702 = vmax.f32 %v1686, 0.0
          %v1703 = vmax.f32 %v1687, 0.0
          %v1704 = vmax.f32 %v1688, 0.0
          %v1705 = vmax.f32 %v1689, 0.0
          %v1706 = vmax.f32 %v1690, 0.0
          %v1707 = vmax.f32 %v1691, 0.0
          %v1708 = vmax.f32 %v1692, 0.0
          %v1709 = vmax.f32 %v1693, 0.0
          %v1710 = vmax.f32 %v1694, 0.0
          %v1711 = vmax.f32 %v1695, 0.0
          %v1712 = vld [vmem:[%s2] sm:$0xff]
          %v1713 = vld [vmem:[%s2 + $0x8] sm:$0xff]
          %v1714 = vld [vmem:[%s2 + $0x10] sm:$0xff]
          %v1715 = vld [vmem:[%s2 + $0x18] sm:$0xff]
          %v1716 = vld [vmem:[%s2 + $0x20] sm:$0xff]
          %v1717 = vld [vmem:[%s2 + $0x28] sm:$0xff]
          %v1718 = vld [vmem:[%s2 + $0x30] sm:$0xff]
          %v1719 = vld [vmem:[%s2 + $0x38] sm:$0xff]
          %v1720 = vld [vmem:[%s2 + $0x40] sm:$0xff]
          %v1721 = vld [vmem:[%s2 + $0x48] sm:$0xff]
          %v1722 = vld [vmem:[%s2 + $0x50] sm:$0xff]
          %v1723 = vld [vmem:[%s2 + $0x58] sm:$0xff]
          %v1724 = vld [vmem:[%s2 + $0x60] sm:$0xff]
          %v1725 = vld [vmem:[%s2 + $0x68] sm:$0xff]
          %v1726 = vld [vmem:[%s2 + $0x70] sm:$0xff]
          %v1727 = vld [vmem:[%s2 + $0x78] sm:$0xff]
          %v1728 = vadd.f32 %v1696, 1e-05
          %v1729 = vadd.f32 %v1697, 1e-05
          %v1730 = vadd.f32 %v1698, 1e-05
          %v1731 = vadd.f32 %v1699, 1e-05
          %v1732 = vadd.f32 %v1700, 1e-05
          %v1733 = vadd.f32 %v1701, 1e-05
          %v1734 = vadd.f32 %v1702, 1e-05
          %v1735 = vadd.f32 %v1703, 1e-05
          %v1736 = vadd.f32 %v1704, 1e-05
          %v1737 = vadd.f32 %v1705, 1e-05
          %v1738 = vadd.f32 %v1706, 1e-05
          %v1739 = vadd.f32 %v1707, 1e-05
          %v1740 = vadd.f32 %v1708, 1e-05
          %v1741 = vadd.f32 %v1709, 1e-05
          %v1742 = vadd.f32 %v1710, 1e-05
          %v1743 = vadd.f32 %v1711, 1e-05
          %v1744 = vrsqrt.pop %v1728
          %v1745 = vrsqrt.pop %v1729
          %v1746 = vrsqrt.pop %v1730
          %v1747 = vrsqrt.pop %v1731
          %v1748 = vrsqrt.pop %v1732
          %v1749 = vrsqrt.pop %v1733
          %v1750 = vrsqrt.pop %v1734
          %v1751 = vrsqrt.pop %v1735
          %v1752 = vrsqrt.pop %v1736
          %v1753 = vrsqrt.pop %v1737
          %v1754 = vrsqrt.pop %v1738
          %v1755 = vrsqrt.pop %v1739
          %v1756 = vrsqrt.pop %v1740
          %v1757 = vrsqrt.pop %v1741
          %v1758 = vrsqrt.pop %v1742
          %v1759 = vrsqrt.pop %v1743
          %v1760 = vmul.f32 %v1712, %v1744
          %v1761 = vmul.f32 %v1713, %v1745
          %v1762 = vmul.f32 %v1714, %v1746
          %v1763 = vmul.f32 %v1715, %v1747
          %v1764 = vmul.f32 %v1716, %v1748
          %v1765 = vmul.f32 %v1717, %v1749
          %v1766 = vmul.f32 %v1718, %v1750
          %v1767 = vmul.f32 %v1719, %v1751
          %v1768 = vmul.f32 %v1720, %v1752
          %v1769 = vmul.f32 %v1721, %v1753
          %v1770 = vmul.f32 %v1722, %v1754
          %v1771 = vmul.f32 %v1723, %v1755
          %v1772 = vmul.f32 %v1724, %v1756
          %v1773 = vmul.f32 %v1725, %v1757
          %v1774 = vmul.f32 %v1726, %v1758
          %v1775 = vmul.f32 %v1727, %v1759
          %v1776 = vld [vmem:[%s3] sm:$0xff]
          %v1777 = vld [vmem:[%s3 + $0x8] sm:$0xff]
          %v1778 = vld [vmem:[%s3 + $0x10] sm:$0xff]
          %v1779 = vld [vmem:[%s3 + $0x18] sm:$0xff]
          %v1780 = vld [vmem:[%s3 + $0x20] sm:$0xff]
          %v1781 = vld [vmem:[%s3 + $0x28] sm:$0xff]
          %v1782 = vld [vmem:[%s3 + $0x30] sm:$0xff]
          %v1783 = vld [vmem:[%s3 + $0x38] sm:$0xff]
          %v1784 = vld [vmem:[%s3 + $0x40] sm:$0xff]
          %v1785 = vld [vmem:[%s3 + $0x48] sm:$0xff]
          %v1786 = vld [vmem:[%s3 + $0x50] sm:$0xff]
          %v1787 = vld [vmem:[%s3 + $0x58] sm:$0xff]
          %v1788 = vld [vmem:[%s3 + $0x60] sm:$0xff]
          %v1789 = vld [vmem:[%s3 + $0x68] sm:$0xff]
          %v1790 = vld [vmem:[%s3 + $0x70] sm:$0xff]
          %v1791 = vld [vmem:[%s3 + $0x78] sm:$0xff]
          %v1792 = vmul.f32 %v1552, %v1760
          %v1793 = vmul.f32 %v1553, %v1761
          %v1794 = vmul.f32 %v1554, %v1762
          %v1795 = vmul.f32 %v1555, %v1763
          %v1796 = vmul.f32 %v1556, %v1764
          %v1797 = vmul.f32 %v1557, %v1765
          %v1798 = vmul.f32 %v1558, %v1766
          %v1799 = vmul.f32 %v1559, %v1767
          %v1800 = vmul.f32 %v1560, %v1768
          %v1801 = vmul.f32 %v1561, %v1769
          %v1802 = vmul.f32 %v1562, %v1770
          %v1803 = vmul.f32 %v1563, %v1771
          %v1804 = vmul.f32 %v1564, %v1772
          %v1805 = vmul.f32 %v1565, %v1773
          %v1806 = vmul.f32 %v1566, %v1774
          %v1807 = vmul.f32 %v1567, %v1775
          %v1808 = vsub.f32 %v1776, %v1792
          %v1809 = vsub.f32 %v1777, %v1793
          %v1810 = vsub.f32 %v1778, %v1794
          %v1811 = vsub.f32 %v1779, %v1795
          %v1812 = vsub.f32 %v1780, %v1796
          %v1813 = vsub.f32 %v1781, %v1797
          %v1814 = vsub.f32 %v1782, %v1798
          %v1815 = vsub.f32 %v1783, %v1799
          %v1816 = vsub.f32 %v1784, %v1800
          %v1817 = vsub.f32 %v1785, %v1801
          %v1818 = vsub.f32 %v1786, %v1802
          %v1819 = vsub.f32 %v1787, %v1803
          %v1820 = vsub.f32 %v1788, %v1804
          %v1821 = vsub.f32 %v1789, %v1805
          %v1822 = vsub.f32 %v1790, %v1806
          %v1823 = vsub.f32 %v1791, %v1807
          %vm1824 = vcmask 7168
          %1825 = vst.msk [vmem:[%s4] sm:$0xff] %vm1824, %v1760
          %1826 = vst.msk [vmem:[%s4 + $0x8] sm:$0xff] %vm1824, %v1761
          %1827 = vst.msk [vmem:[%s4 + $0x10] sm:$0xff] %vm1824, %v1762
          %1828 = vst.msk [vmem:[%s4 + $0x18] sm:$0xff] %vm1824, %v1763
          %1829 = vst.msk [vmem:[%s4 + $0x20] sm:$0xff] %vm1824, %v1764
          %1830 = vst.msk [vmem:[%s4 + $0x28] sm:$0xff] %vm1824, %v1765
          %1831 = vst.msk [vmem:[%s4 + $0x30] sm:$0xff] %vm1824, %v1766
          %1832 = vst.msk [vmem:[%s4 + $0x38] sm:$0xff] %vm1824, %v1767
          %1833 = vst.msk [vmem:[%s4 + $0x40] sm:$0xff] %vm1824, %v1768
          %1834 = vst.msk [vmem:[%s4 + $0x48] sm:$0xff] %vm1824, %v1769
          %1835 = vst.msk [vmem:[%s4 + $0x50] sm:$0xff] %vm1824, %v1770
          %1836 = vst.msk [vmem:[%s4 + $0x58] sm:$0xff] %vm1824, %v1771
          %1837 = vst.msk [vmem:[%s4 + $0x60] sm:$0xff] %vm1824, %v1772
          %1838 = vst.msk [vmem:[%s4 + $0x68] sm:$0xff] %vm1824, %v1773
          %1839 = vst.msk [vmem:[%s4 + $0x70] sm:$0xff] %vm1824, %v1774
          %1840 = vst.msk [vmem:[%s4 + $0x78] sm:$0xff] %vm1824, %v1775
          %1857 = vrot.lane.b32.xlu0 %v1808, 1
          %v1858 = vpop.permute.xlu0 %1857
          %1859 = vrot.lane.b32.xlu0 %v1809, 1
          %v1860 = vpop.permute.xlu0 %1859
          %1861 = vrot.lane.b32.xlu0 %v1810, 1
          %v1862 = vpop.permute.xlu0 %1861
          %1863 = vrot.lane.b32.xlu0 %v1811, 1
          %v1864 = vpop.permute.xlu0 %1863
          %1865 = vrot.lane.b32.xlu0 %v1812, 1
          %v1866 = vpop.permute.xlu0 %1865
          %1867 = vrot.lane.b32.xlu0 %v1813, 1
          %v1868 = vpop.permute.xlu0 %1867
          %1869 = vrot.lane.b32.xlu0 %v1814, 1
          %v1870 = vpop.permute.xlu0 %1869
          %1871 = vrot.lane.b32.xlu0 %v1815, 1
          %v1872 = vpop.permute.xlu0 %1871
          %1873 = vrot.lane.b32.xlu0 %v1816, 1
          %v1874 = vpop.permute.xlu0 %1873
          %1875 = vrot.lane.b32.xlu0 %v1817, 1
          %v1876 = vpop.permute.xlu0 %1875
          %1877 = vrot.lane.b32.xlu0 %v1818, 1
          %v1878 = vpop.permute.xlu0 %1877
          %1879 = vrot.lane.b32.xlu0 %v1819, 1
          %v1880 = vpop.permute.xlu0 %1879
          %1881 = vrot.lane.b32.xlu0 %v1820, 1
          %v1882 = vpop.permute.xlu0 %1881
          %1883 = vrot.lane.b32.xlu0 %v1821, 1
          %v1884 = vpop.permute.xlu0 %1883
          %1885 = vrot.lane.b32.xlu0 %v1822, 1
          %v1886 = vpop.permute.xlu0 %1885
          %1887 = vrot.lane.b32.xlu0 %v1823, 1
          %v1888 = vpop.permute.xlu0 %1887
          %vm1905 = vcmask 15368
          %1906 = vst.msk [vmem:[%s4] sm:$0xff] %vm1905, %v1858
          %1907 = vst.msk [vmem:[%s4 + $0x8] sm:$0xff] %vm1905, %v1860
          %1908 = vst.msk [vmem:[%s4 + $0x10] sm:$0xff] %vm1905, %v1862
          %1909 = vst.msk [vmem:[%s4 + $0x18] sm:$0xff] %vm1905, %v1864
          %1910 = vst.msk [vmem:[%s4 + $0x20] sm:$0xff] %vm1905, %v1866
          %1911 = vst.msk [vmem:[%s4 + $0x28] sm:$0xff] %vm1905, %v1868
          %1912 = vst.msk [vmem:[%s4 + $0x30] sm:$0xff] %vm1905, %v1870
          %1913 = vst.msk [vmem:[%s4 + $0x38] sm:$0xff] %vm1905, %v1872
          %1914 = vst.msk [vmem:[%s4 + $0x40] sm:$0xff] %vm1905, %v1874
          %1915 = vst.msk [vmem:[%s4 + $0x48] sm:$0xff] %vm1905, %v1876
          %1916 = vst.msk [vmem:[%s4 + $0x50] sm:$0xff] %vm1905, %v1878
          %1917 = vst.msk [vmem:[%s4 + $0x58] sm:$0xff] %vm1905, %v1880
          %1918 = vst.msk [vmem:[%s4 + $0x60] sm:$0xff] %vm1905, %v1882
          %1919 = vst.msk [vmem:[%s4 + $0x68] sm:$0xff] %vm1905, %v1884
          %1920 = vst.msk [vmem:[%s4 + $0x70] sm:$0xff] %vm1905, %v1886
          %1921 = vst.msk [vmem:[%s4 + $0x78] sm:$0xff] %vm1905, %v1888
        $region56: #{tpu_custom_call.1} parent=35 // pred_fallthru
          _
        // Predicated region
        $region57: #{tpu_custom_call.1} parent=35 // pred_check
          %p1922 = pneg %p134
        $region58: #{tpu_custom_call.1} parent=35 // pred_check_branch
          %1924 = sbr.rel (%p1922) target = $region60
        $region59: #{tpu_custom_call.1} parent=35 // pred_region
          _
        $region60: #{tpu_custom_call.1} parent=35 // pred_fallthru
          _
        // Predicated region
        $region61: #{tpu_custom_call.1} parent=35 // pred_check
          %p1925 = pneg %p134
        $region62: #{tpu_custom_call.1} parent=35 // pred_check_branch
          %1927 = sbr.rel (%p1925) target = $region64
        $region63: #{tpu_custom_call.1} parent=35 // pred_region
          _
        $region64: #{tpu_custom_call.1} parent=35 // pred_fallthru
          _
      $region36: #{tpu_custom_call.1} parent=5 // pred_fallthru
        _
      %p1928 = scmp.le.s32.totalorder 2, %s13
      // Predicated region
      $region65: #{tpu_custom_call.1} parent=5 // pred_check
        %p1929 = pneg %p1928
      $region66: #{tpu_custom_call.1} parent=5 // pred_check_branch
        %1931 = sbr.rel (%p1929) target = $region68
      $region67: #{tpu_custom_call.1} parent=5 // pred_region
        %s1932 = ssub.s32 %s13, 2
      $region68: #{tpu_custom_call.1} parent=5 // pred_fallthru
        _
    $region6: #{tpu_custom_call.1} parent=1 // loop_footer
      %s17 = sadd.s32 1, %s13
    $region7: #{tpu_custom_call.1} parent=1 // loop_footer_branch
      %12 = sbr.rel target = $region3
    $region8: #{tpu_custom_call.1} parent=1 // loop_exit
      _
    %1933 = vsyncpa [#allocation6], 1
    %s1934 = scalar_lea.sflag [#allocation6], 1
    %1935 = vsyncpa %s1934, 1

</llo_original>
